<compile_context>
chip_gen: v5e
topology: v5e:2x2
jax: 0.10.0
libtpu: 0.0.40
codegen_flags: <defaults>
</compile_context>

<pallas_src>
import functools
import math

import jax
import jax.numpy as jnp
from jax import lax
from jax.experimental import pallas as pl
from jax.experimental.pallas import tpu as pltpu  # noqa: F401  (TPU backend)

EPS = 1e-6
NEG_INF = -1e9

# Row indices into the packed per-channel-vector table (see pack_params).
_LN0G, _LN0B, _LN1G, _LN1B, _LN2G, _LN2B = 0, 1, 2, 3, 4, 5
_SA_BQKV, _SA_BO, _CA_BQ, _CA_BKV, _CA_BO, _FF_B1, _FF_B2 = 6, 7, 8, 9, 10, 11, 12
_N_VEC_ROWS = 13


# ------------------------------ fused kernel --------------------------------

def _decoder_layer_kernel(
    x_ref, mem_ref, self_bias_ref, src_bias_ref, vec_ref,
    sa_wqkv_ref, sa_wo_ref, ca_wq_ref, ca_wkv_ref, ca_wo_ref,
    ff_w1_ref, ff_w2_ref,
    o_ref, *, h):
    d = x_ref.shape[-1]
    d_ff = ff_w1_ref.shape[-1]
    dk = d // h

    def row(i, n):
        # (1, n) slice out of the packed per-channel-vector table.
        return vec_ref[i:i + 1, :n]

    def layernorm(z, gi, bi):
        mean = jnp.mean(z, axis=-1, keepdims=True)
        zc = z - mean
        # PyTorch tensor.std() uses the unbiased (N-1) estimator.
        std = jnp.sqrt(jnp.sum(zc * zc, axis=-1, keepdims=True) * (1.0 / (d - 1)))
        return row(gi, d) * zc * pl.reciprocal(std + EPS, approx=False) + row(bi, d)

    def mha(q_src, kv_src, bias, wo, bo, q_off, k_off, v_off):
        # Q (already pre-scaled by 1/sqrt(dk) via packed weights) lives at
        # column q_off of q_src; K / V at k_off / v_off of kv_src.
        # bias: (Nq, Nk) additive mask (0 keep / -1e9 drop, block-diag in batch).
        acc = None
        for hh in range(h):
            lo = hh * dk
            qh = q_src[:, q_off + lo: q_off + lo + dk]       # (Nq, dk)
            kh = kv_src[:, k_off + lo: k_off + lo + dk]      # (Nk, dk)
            vh = kv_src[:, v_off + lo: v_off + lo + dk]      # (Nk, dk)
            # contract last dims directly (no explicit transpose)
            s = lax.dot_general(qh, kh, (((1,), (1,)), ((), ())),
                                preferred_element_type=jnp.float32) + bias
            m = jnp.max(s, axis=-1, keepdims=True)
            e = jnp.exp(s - m)                               # (Nq, Nk)
            inv = pl.reciprocal(jnp.sum(e, axis=-1, keepdims=True), approx=False)
            # normalize AFTER the P@V matmul (on (Nq,dk), not (Nq,Nk))
            head = jnp.dot(e, vh, preferred_element_type=jnp.float32) * inv
            # fused head-merge + output projection: sum_h head_h @ Wo[h*dk:(h+1)*dk]
            part = jnp.dot(head, wo[lo:lo + dk, :],
                           preferred_element_type=jnp.float32)              # (Nq, D)
            acc = part if acc is None else acc + part
        return acc + bo

    x = x_ref[...]        # (B*T, D)
    mem = mem_ref[...]    # (B*S, D)

    # ---- sublayer 0: x + self_attn(norm(x), norm(x), norm(x), tgt_mask) ----
    y = layernorm(x, _LN0G, _LN0B)
    qkv = jnp.dot(y, sa_wqkv_ref[...],
                  preferred_element_type=jnp.float32) + row(_SA_BQKV, 3 * d)
    x = x + mha(qkv, qkv, self_bias_ref[...], sa_wo_ref[...], row(_SA_BO, d),
                0, d, 2 * d)

    # ---- sublayer 1: x + src_attn(norm(x), memory, memory, src_mask) ----
    y = layernorm(x, _LN1G, _LN1B)
    q = jnp.dot(y, ca_wq_ref[...],
                preferred_element_type=jnp.float32) + row(_CA_BQ, d)
    kv = jnp.dot(mem, ca_wkv_ref[...],
                 preferred_element_type=jnp.float32) + row(_CA_BKV, 2 * d)
    x = x + mha(q, kv, src_bias_ref[...], ca_wo_ref[...], row(_CA_BO, d),
                0, 0, d)

    # ---- sublayer 2: x + feed_forward(norm(x)) ----
    y = layernorm(x, _LN2G, _LN2B)
    hid = jnp.maximum(
        jnp.dot(y, ff_w1_ref[...], preferred_element_type=jnp.float32)
        + row(_FF_B1, d_ff), 0.0)
    ff = jnp.dot(hid, ff_w2_ref[...],
                 preferred_element_type=jnp.float32) + row(_FF_B2, d)
    o_ref[...] = (x + ff).astype(o_ref.dtype)


# ------------------------------ one-time packing -----------------------------

def pack_params(p):
    """One-time repack of DecoderLayer weights into kernel-friendly operands.

    * Wq/Wk/Wv fused into a single (D, 3D) QKV weight; cross-attn Wk/Wv into (D, 2D).
    * The 1/sqrt(d_k) attention scale is folded into Wq / bq.
    * All 13 per-channel vectors (LayerNorm gains/biases + all linear biases)
      are stacked into ONE lane-padded (13, 128) table -> one DMA instead of 13.
    """
    d = p["ln0_g"].shape[0]
    h = p["h"]
    scale = 1.0 / math.sqrt(d // h)
    sa, ca = p["self_attn"], p["src_attn"]

    sa_wqkv = jnp.concatenate([sa["wq"] * scale, sa["wk"], sa["wv"]], axis=1)   # (D, 3D)
    ca_wkv = jnp.concatenate([ca["wk"], ca["wv"]], axis=1)                      # (D, 2D)

    rows = [None] * _N_VEC_ROWS
    rows[_LN0G], rows[_LN0B] = p["ln0_g"], p["ln0_b"]
    rows[_LN1G], rows[_LN1B] = p["ln1_g"], p["ln1_b"]
    rows[_LN2G], rows[_LN2B] = p["ln2_g"], p["ln2_b"]
    rows[_SA_BQKV] = jnp.concatenate([sa["bq"] * scale, sa["bk"], sa["bv"]])
    rows[_SA_BO] = sa["bo"]
    rows[_CA_BQ] = ca["bq"] * scale
    rows[_CA_BKV] = jnp.concatenate([ca["bk"], ca["bv"]])
    rows[_CA_BO] = ca["bo"]
    rows[_FF_B1] = p["ff_b1"]
    rows[_FF_B2] = p["ff_b2"]

    lane = max(128, -(-max(r.shape[0] for r in rows) // 128) * 128)
    vec = jnp.stack([jnp.pad(r.astype(jnp.float32), (0, lane - r.shape[0]))
                     for r in rows])                                            # (13, 128)

    return dict(vec=vec,
                sa_wqkv=sa_wqkv, sa_wo=sa["wo"],
                ca_wq=ca["wq"] * scale, ca_wkv=ca_wkv, ca_wo=ca["wo"],
                ff_w1=p["ff_w1"], ff_w2=p["ff_w2"])


# ------------------------------ wrapper --------------------------------------

@functools.partial(jax.jit, static_argnames=("h",))
def decoder_layer_forward(x, memory, src_mask, tgt_mask, pk, *, h):
    b, t, d = x.shape
    s = memory.shape[1]

    # Additive block-diagonal masks over the flattened (B*T) x (B*Tk) score
    # matrices: kept positions -> 0, masked / cross-batch positions -> -1e9.
    eye_b = jnp.eye(b, dtype=bool)
    tgt_keep = jnp.broadcast_to(tgt_mask, (t, t)) != 0                      # (T, T)
    src_keep = jnp.broadcast_to(src_mask, (t, s)) != 0                      # (T, S)
    self_keep = (eye_b[:, None, :, None] & tgt_keep[None, :, None, :]).reshape(b * t, b * t)
    cross_keep = (eye_b[:, None, :, None] & src_keep[None, :, None, :]).reshape(b * t, b * s)
    self_bias = jnp.where(self_keep, 0.0, NEG_INF).astype(jnp.float32)
    src_bias = jnp.where(cross_keep, 0.0, NEG_INF).astype(jnp.float32)

    out2d = pl.pallas_call(
        functools.partial(_decoder_layer_kernel, h=h),
        out_shape=jax.ShapeDtypeStruct((b * t, d), jnp.float32),
    )(
        x.reshape(b * t, d), memory.reshape(b * s, d), self_bias, src_bias,
        pk["vec"],
        pk["sa_wqkv"], pk["sa_wo"],
        pk["ca_wq"], pk["ca_wkv"], pk["ca_wo"],
        pk["ff_w1"], pk["ff_w2"],
    )
    return out2d.reshape(b, t, d)


# ----------------------------- Pure-JAX reference ---------------------------

def ref_forward(x, memory, src_mask, tgt_mask, p):
    b, t, d = x.shape
    h = p["h"]
    dk = d // h

    def ln(z, g, be):
        mean = z.mean(-1, keepdims=True)
        std = jnp.sqrt(((z - mean) ** 2).sum(-1, keepdims=True) / (d - 1))
        return g * (z - mean) / (std + EPS) + be

    def mha(qi, ki, vi, mask, ap):
        tq, tk = qi.shape[1], ki.shape[1]

        def proj(z, w, bias, tt):
            return (z.reshape(-1, d) @ w + bias).reshape(b, tt, h, dk).transpose(0, 2, 1, 3)

        q = proj(qi, ap["wq"], ap["bq"], tq)
        k = proj(ki, ap["wk"], ap["bk"], tk)
        v = proj(vi, ap["wv"], ap["bv"], tk)
        scores = jnp.einsum("bhqd,bhkd->bhqk", q, k) / math.sqrt(dk)
        m2 = jnp.broadcast_to(mask, (tq, tk))
        scores = jnp.where(m2[None, None] == 0, -1e9, scores)
        att = jax.nn.softmax(scores, axis=-1)
        o = jnp.einsum("bhqk,bhkd->bhqd", att, v).transpose(0, 2, 1, 3).reshape(-1, d)
        return (o @ ap["wo"] + ap["bo"]).reshape(b, tq, d)

    y = ln(x, p["ln0_g"], p["ln0_b"])
    x = x + mha(y, y, y, tgt_mask, p["self_attn"])
    y = ln(x, p["ln1_g"], p["ln1_b"])
    x = x + mha(y, memory, memory, src_mask, p["src_attn"])
    y = ln(x, p["ln2_g"], p["ln2_b"])
    ff = jnp.maximum(y.reshape(-1, d) @ p["ff_w1"] + p["ff_b1"], 0.0) @ p["ff_w2"] + p["ff_b2"]
    return x + ff.reshape(b, t, d)


# ----------------------------- Parameter init -------------------------------

def init_params(key, d_model, h, d_ff):
    keys = iter(jax.random.split(key, 20))

    def lin(din, dout):
        w = jax.random.normal(next(keys), (din, dout), jnp.float32) * 0.1
        b = jax.random.normal(next(keys), (dout,), jnp.float32) * 0.1
        return w, b

    def attn_params():
        wq, bq = lin(d_model, d_model)
        wk, bk = lin(d_model, d_model)
        wv, bv = lin(d_model, d_model)
        wo, bo = lin(d_model, d_model)
        return dict(wq=wq, bq=bq, wk=wk, bk=bk, wv=wv, bv=bv, wo=wo, bo=bo)

    self_attn = attn_params()
    src_attn = attn_params()
    ff_w1, ff_b1 = lin(d_model, d_ff)
    ff_w2, ff_b2 = lin(d_ff, d_model)

    ones = jnp.ones((d_model,), jnp.float32)
    zeros = jnp.zeros((d_model,), jnp.float32)
    return dict(
        h=h,
        self_attn=self_attn,
        src_attn=src_attn,
        ff_w1=ff_w1, ff_b1=ff_b1, ff_w2=ff_w2, ff_b2=ff_b2,
        ln0_g=ones, ln0_b=zeros,
        ln1_g=ones, ln1_b=zeros,
        ln2_g=ones, ln2_b=zeros,
    )


# ----------------------------------- Main ------------------------------------

if __name__ == "__main__":
    B, T, S, D, H, DFF = 2, 8, 8, 32, 4, 64

    key = jax.random.PRNGKey(0)
    kx, km, kp = jax.random.split(key, 3)
    x = jax.random.normal(kx, (B, T, D), jnp.float32)
    memory = jax.random.normal(km, (B, S, D), jnp.float32)

    # causal target mask (shared across batch/heads), padding-style source mask
    tgt_mask = jnp.tril(jnp.ones((T, T), jnp.float32))
    src_mask = jnp.ones((1, S), jnp.float32).at[0, S - 1].set(0.0)

    params = init_params(kp, D, H, DFF)
    packed = pack_params(params)          # one-time weight repack (amortized)

    out = decoder_layer_forward(x, memory, src_mask, tgt_mask, packed, h=H)
    out = jax.block_until_ready(out)

    ref = ref_forward(x, memory, src_mask, tgt_mask, params)
    assert out.shape == (B, T, D)
    assert jnp.max(jnp.abs(out - ref)) < 2e-4, "mismatch vs. pure-JAX reference"

    print("KERNEL_OK")
</pallas_src>

<mosaic_0001>
module attributes {stable_mosaic.version = 11 : i64} {
  func.func @_decoder_layer_kernel(%arg0: memref<16x32xf32, #tpu.memory_space<vmem>>, %arg1: memref<16x32xf32, #tpu.memory_space<vmem>>, %arg2: memref<16x16xf32, #tpu.memory_space<vmem>>, %arg3: memref<16x16xf32, #tpu.memory_space<vmem>>, %arg4: memref<13x128xf32, #tpu.memory_space<vmem>>, %arg5: memref<32x96xf32, #tpu.memory_space<vmem>>, %arg6: memref<32x32xf32, #tpu.memory_space<vmem>>, %arg7: memref<32x32xf32, #tpu.memory_space<vmem>>, %arg8: memref<32x64xf32, #tpu.memory_space<vmem>>, %arg9: memref<32x32xf32, #tpu.memory_space<vmem>>, %arg10: memref<32x64xf32, #tpu.memory_space<vmem>>, %arg11: memref<64x32xf32, #tpu.memory_space<vmem>>, %arg12: memref<16x32xf32, #tpu.memory_space<vmem>>) attributes {dimension_semantics = [], scalar_prefetch = 0 : i64, scratch_operands = 0 : i64, tpu.core_type = #tpu.core_type<tc>} {
    %c0 = arith.constant 0 : index
    %c0_0 = arith.constant 0 : index
    %0 = vector.load %arg0[%c0, %c0_0] : memref<16x32xf32, #tpu.memory_space<vmem>>, vector<16x32xf32>
    %c0_1 = arith.constant 0 : index
    %c0_2 = arith.constant 0 : index
    %1 = vector.load %arg1[%c0_1, %c0_2] : memref<16x32xf32, #tpu.memory_space<vmem>>, vector<16x32xf32>
    %cst = arith.constant dense<0.000000e+00> : vector<16xf32>
    %2 = vector.multi_reduction <add>, %0, %cst [1] : vector<16x32xf32> to vector<16xf32>
    %3 = vector.shape_cast %2 : vector<16xf32> to vector<16x1xf32>
    %cst_3 = arith.constant 3.200000e+01 : f32
    %4 = vector.broadcast %cst_3 : f32 to vector<16x1xf32>
    %5 = arith.divf %3, %4 : vector<16x1xf32>
    %6 = vector.broadcast %5 : vector<16x1xf32> to vector<16x32xf32>
    %7 = arith.subf %0, %6 : vector<16x32xf32>
    %8 = arith.mulf %7, %7 : vector<16x32xf32>
    %cst_4 = arith.constant dense<0.000000e+00> : vector<16xf32>
    %9 = vector.multi_reduction <add>, %8, %cst_4 [1] : vector<16x32xf32> to vector<16xf32>
    %10 = vector.shape_cast %9 : vector<16xf32> to vector<16x1xf32>
    %cst_5 = arith.constant 0.0322580636 : f32
    %11 = vector.broadcast %cst_5 : f32 to vector<16x1xf32>
    %12 = arith.mulf %10, %11 : vector<16x1xf32>
    %13 = math.sqrt %12 : vector<16x1xf32>
    %c0_6 = arith.constant 0 : index
    %c0_7 = arith.constant 0 : index
    %14 = vector.load %arg4[%c0_6, %c0_7] : memref<13x128xf32, #tpu.memory_space<vmem>>, vector<1x32xf32>
    %15 = vector.broadcast %14 : vector<1x32xf32> to vector<16x32xf32>
    %16 = arith.mulf %15, %7 : vector<16x32xf32>
    %cst_8 = arith.constant 9.99999997E-7 : f32
    %17 = vector.broadcast %cst_8 : f32 to vector<16x1xf32>
    %18 = arith.addf %13, %17 : vector<16x1xf32>
    %19 = tpu.reciprocal %18 : vector<16x1xf32> -> vector<16x1xf32>
    %20 = vector.broadcast %19 : vector<16x1xf32> to vector<16x32xf32>
    %21 = arith.mulf %16, %20 : vector<16x32xf32>
    %c1 = arith.constant 1 : index
    %c0_9 = arith.constant 0 : index
    %22 = vector.load %arg4[%c1, %c0_9] : memref<13x128xf32, #tpu.memory_space<vmem>>, vector<1x32xf32>
    %23 = vector.broadcast %22 : vector<1x32xf32> to vector<16x32xf32>
    %24 = arith.addf %21, %23 : vector<16x32xf32>
    %c0_10 = arith.constant 0 : index
    %c0_11 = arith.constant 0 : index
    %25 = vector.load %arg5[%c0_10, %c0_11] : memref<32x96xf32, #tpu.memory_space<vmem>>, vector<32x96xf32>
    %cst_12 = arith.constant dense<0.000000e+00> : vector<16x96xf32>
    %26 = tpu.matmul %24, %25, %cst_12 {dimension_numbers = #tpu.dot_dimension_numbers<[1], [0], [0], [1], [0, 0, 1, 1], [], []>} : vector<16x32xf32>, vector<32x96xf32>, vector<16x96xf32> -> vector<16x96xf32>
    %c6 = arith.constant 6 : index
    %c0_13 = arith.constant 0 : index
    %27 = vector.load %arg4[%c6, %c0_13] : memref<13x128xf32, #tpu.memory_space<vmem>>, vector<1x96xf32>
    %28 = vector.broadcast %27 : vector<1x96xf32> to vector<16x96xf32>
    %29 = arith.addf %26, %28 : vector<16x96xf32>
    %c0_14 = arith.constant 0 : index
    %c0_15 = arith.constant 0 : index
    %30 = vector.load %arg2[%c0_14, %c0_15] : memref<16x16xf32, #tpu.memory_space<vmem>>, vector<16x16xf32>
    %c0_16 = arith.constant 0 : index
    %c0_17 = arith.constant 0 : index
    %31 = vector.load %arg6[%c0_16, %c0_17] : memref<32x32xf32, #tpu.memory_space<vmem>>, vector<32x32xf32>
    %c7 = arith.constant 7 : index
    %c0_18 = arith.constant 0 : index
    %32 = vector.load %arg4[%c7, %c0_18] : memref<13x128xf32, #tpu.memory_space<vmem>>, vector<1x32xf32>
    %33 = vector.extract_strided_slice %29 {offsets = [0, 0], sizes = [16, 8], strides = [1, 1]} : vector<16x96xf32> to vector<16x8xf32>
    %34 = vector.extract_strided_slice %29 {offsets = [0, 32], sizes = [16, 8], strides = [1, 1]} : vector<16x96xf32> to vector<16x8xf32>
    %35 = vector.extract_strided_slice %29 {offsets = [0, 64], sizes = [16, 8], strides = [1, 1]} : vector<16x96xf32> to vector<16x8xf32>
    %cst_19 = arith.constant dense<0.000000e+00> : vector<16x16xf32>
    %36 = tpu.matmul %33, %34, %cst_19 {dimension_numbers = #tpu.dot_dimension_numbers<[1], [1], [0], [0], [0, 0, 1, 0], [], []>} : vector<16x8xf32>, vector<16x8xf32>, vector<16x16xf32> -> vector<16x16xf32>
    %37 = arith.addf %36, %30 : vector<16x16xf32>
    %cst_20 = arith.constant dense<0xFF800000> : vector<16xf32>
    %38 = vector.multi_reduction <maximumf>, %37, %cst_20 [1] : vector<16x16xf32> to vector<16xf32>
    %39 = vector.shape_cast %38 : vector<16xf32> to vector<16x1xf32>
    %40 = vector.broadcast %39 : vector<16x1xf32> to vector<16x16xf32>
    %41 = arith.subf %37, %40 : vector<16x16xf32>
    %42 = math.exp %41 : vector<16x16xf32>
    %cst_21 = arith.constant dense<0.000000e+00> : vector<16xf32>
    %43 = vector.multi_reduction <add>, %42, %cst_21 [1] : vector<16x16xf32> to vector<16xf32>
    %44 = vector.shape_cast %43 : vector<16xf32> to vector<16x1xf32>
    %45 = tpu.reciprocal %44 : vector<16x1xf32> -> vector<16x1xf32>
    %cst_22 = arith.constant dense<0.000000e+00> : vector<16x8xf32>
    %46 = tpu.matmul %42, %35, %cst_22 {dimension_numbers = #tpu.dot_dimension_numbers<[1], [0], [0], [1], [0, 0, 1, 1], [], []>} : vector<16x16xf32>, vector<16x8xf32>, vector<16x8xf32> -> vector<16x8xf32>
    %47 = vector.broadcast %45 : vector<16x1xf32> to vector<16x8xf32>
    %48 = arith.mulf %46, %47 : vector<16x8xf32>
    %49 = vector.extract_strided_slice %31 {offsets = [0, 0], sizes = [8, 32], strides = [1, 1]} : vector<32x32xf32> to vector<8x32xf32>
    %cst_23 = arith.constant dense<0.000000e+00> : vector<16x32xf32>
    %50 = tpu.matmul %48, %49, %cst_23 {dimension_numbers = #tpu.dot_dimension_numbers<[1], [0], [0], [1], [0, 0, 1, 1], [], []>} : vector<16x8xf32>, vector<8x32xf32>, vector<16x32xf32> -> vector<16x32xf32>
    %51 = vector.extract_strided_slice %29 {offsets = [0, 8], sizes = [16, 8], strides = [1, 1]} : vector<16x96xf32> to vector<16x8xf32>
    %52 = vector.extract_strided_slice %29 {offsets = [0, 40], sizes = [16, 8], strides = [1, 1]} : vector<16x96xf32> to vector<16x8xf32>
    %53 = vector.extract_strided_slice %29 {offsets = [0, 72], sizes = [16, 8], strides = [1, 1]} : vector<16x96xf32> to vector<16x8xf32>
    %cst_24 = arith.constant dense<0.000000e+00> : vector<16x16xf32>
    %54 = tpu.matmul %51, %52, %cst_24 {dimension_numbers = #tpu.dot_dimension_numbers<[1], [1], [0], [0], [0, 0, 1, 0], [], []>} : vector<16x8xf32>, vector<16x8xf32>, vector<16x16xf32> -> vector<16x16xf32>
    %55 = arith.addf %54, %30 : vector<16x16xf32>
    %cst_25 = arith.constant dense<0xFF800000> : vector<16xf32>
    %56 = vector.multi_reduction <maximumf>, %55, %cst_25 [1] : vector<16x16xf32> to vector<16xf32>
    %57 = vector.shape_cast %56 : vector<16xf32> to vector<16x1xf32>
    %58 = vector.broadcast %57 : vector<16x1xf32> to vector<16x16xf32>
    %59 = arith.subf %55, %58 : vector<16x16xf32>
    %60 = math.exp %59 : vector<16x16xf32>
    %cst_26 = arith.constant dense<0.000000e+00> : vector<16xf32>
    %61 = vector.multi_reduction <add>, %60, %cst_26 [1] : vector<16x16xf32> to vector<16xf32>
    %62 = vector.shape_cast %61 : vector<16xf32> to vector<16x1xf32>
    %63 = tpu.reciprocal %62 : vector<16x1xf32> -> vector<16x1xf32>
    %cst_27 = arith.constant dense<0.000000e+00> : vector<16x8xf32>
    %64 = tpu.matmul %60, %53, %cst_27 {dimension_numbers = #tpu.dot_dimension_numbers<[1], [0], [0], [1], [0, 0, 1, 1], [], []>} : vector<16x16xf32>, vector<16x8xf32>, vector<16x8xf32> -> vector<16x8xf32>
    %65 = vector.broadcast %63 : vector<16x1xf32> to vector<16x8xf32>
    %66 = arith.mulf %64, %65 : vector<16x8xf32>
    %67 = vector.extract_strided_slice %31 {offsets = [8, 0], sizes = [8, 32], strides = [1, 1]} : vector<32x32xf32> to vector<8x32xf32>
    %cst_28 = arith.constant dense<0.000000e+00> : vector<16x32xf32>
    %68 = tpu.matmul %66, %67, %cst_28 {dimension_numbers = #tpu.dot_dimension_numbers<[1], [0], [0], [1], [0, 0, 1, 1], [], []>} : vector<16x8xf32>, vector<8x32xf32>, vector<16x32xf32> -> vector<16x32xf32>
    %69 = arith.addf %50, %68 : vector<16x32xf32>
    %70 = vector.extract_strided_slice %29 {offsets = [0, 16], sizes = [16, 8], strides = [1, 1]} : vector<16x96xf32> to vector<16x8xf32>
    %71 = vector.extract_strided_slice %29 {offsets = [0, 48], sizes = [16, 8], strides = [1, 1]} : vector<16x96xf32> to vector<16x8xf32>
    %72 = vector.extract_strided_slice %29 {offsets = [0, 80], sizes = [16, 8], strides = [1, 1]} : vector<16x96xf32> to vector<16x8xf32>
    %cst_29 = arith.constant dense<0.000000e+00> : vector<16x16xf32>
    %73 = tpu.matmul %70, %71, %cst_29 {dimension_numbers = #tpu.dot_dimension_numbers<[1], [1], [0], [0], [0, 0, 1, 0], [], []>} : vector<16x8xf32>, vector<16x8xf32>, vector<16x16xf32> -> vector<16x16xf32>
    %74 = arith.addf %73, %30 : vector<16x16xf32>
    %cst_30 = arith.constant dense<0xFF800000> : vector<16xf32>
    %75 = vector.multi_reduction <maximumf>, %74, %cst_30 [1] : vector<16x16xf32> to vector<16xf32>
    %76 = vector.shape_cast %75 : vector<16xf32> to vector<16x1xf32>
    %77 = vector.broadcast %76 : vector<16x1xf32> to vector<16x16xf32>
    %78 = arith.subf %74, %77 : vector<16x16xf32>
    %79 = math.exp %78 : vector<16x16xf32>
    %cst_31 = arith.constant dense<0.000000e+00> : vector<16xf32>
    %80 = vector.multi_reduction <add>, %79, %cst_31 [1] : vector<16x16xf32> to vector<16xf32>
    %81 = vector.shape_cast %80 : vector<16xf32> to vector<16x1xf32>
    %82 = tpu.reciprocal %81 : vector<16x1xf32> -> vector<16x1xf32>
    %cst_32 = arith.constant dense<0.000000e+00> : vector<16x8xf32>
    %83 = tpu.matmul %79, %72, %cst_32 {dimension_numbers = #tpu.dot_dimension_numbers<[1], [0], [0], [1], [0, 0, 1, 1], [], []>} : vector<16x16xf32>, vector<16x8xf32>, vector<16x8xf32> -> vector<16x8xf32>
    %84 = vector.broadcast %82 : vector<16x1xf32> to vector<16x8xf32>
    %85 = arith.mulf %83, %84 : vector<16x8xf32>
    %86 = vector.extract_strided_slice %31 {offsets = [16, 0], sizes = [8, 32], strides = [1, 1]} : vector<32x32xf32> to vector<8x32xf32>
    %cst_33 = arith.constant dense<0.000000e+00> : vector<16x32xf32>
    %87 = tpu.matmul %85, %86, %cst_33 {dimension_numbers = #tpu.dot_dimension_numbers<[1], [0], [0], [1], [0, 0, 1, 1], [], []>} : vector<16x8xf32>, vector<8x32xf32>, vector<16x32xf32> -> vector<16x32xf32>
    %88 = arith.addf %69, %87 : vector<16x32xf32>
    %89 = vector.extract_strided_slice %29 {offsets = [0, 24], sizes = [16, 8], strides = [1, 1]} : vector<16x96xf32> to vector<16x8xf32>
    %90 = vector.extract_strided_slice %29 {offsets = [0, 56], sizes = [16, 8], strides = [1, 1]} : vector<16x96xf32> to vector<16x8xf32>
    %91 = vector.extract_strided_slice %29 {offsets = [0, 88], sizes = [16, 8], strides = [1, 1]} : vector<16x96xf32> to vector<16x8xf32>
    %cst_34 = arith.constant dense<0.000000e+00> : vector<16x16xf32>
    %92 = tpu.matmul %89, %90, %cst_34 {dimension_numbers = #tpu.dot_dimension_numbers<[1], [1], [0], [0], [0, 0, 1, 0], [], []>} : vector<16x8xf32>, vector<16x8xf32>, vector<16x16xf32> -> vector<16x16xf32>
    %93 = arith.addf %92, %30 : vector<16x16xf32>
    %cst_35 = arith.constant dense<0xFF800000> : vector<16xf32>
    %94 = vector.multi_reduction <maximumf>, %93, %cst_35 [1] : vector<16x16xf32> to vector<16xf32>
    %95 = vector.shape_cast %94 : vector<16xf32> to vector<16x1xf32>
    %96 = vector.broadcast %95 : vector<16x1xf32> to vector<16x16xf32>
    %97 = arith.subf %93, %96 : vector<16x16xf32>
    %98 = math.exp %97 : vector<16x16xf32>
    %cst_36 = arith.constant dense<0.000000e+00> : vector<16xf32>
    %99 = vector.multi_reduction <add>, %98, %cst_36 [1] : vector<16x16xf32> to vector<16xf32>
    %100 = vector.shape_cast %99 : vector<16xf32> to vector<16x1xf32>
    %101 = tpu.reciprocal %100 : vector<16x1xf32> -> vector<16x1xf32>
    %cst_37 = arith.constant dense<0.000000e+00> : vector<16x8xf32>
    %102 = tpu.matmul %98, %91, %cst_37 {dimension_numbers = #tpu.dot_dimension_numbers<[1], [0], [0], [1], [0, 0, 1, 1], [], []>} : vector<16x16xf32>, vector<16x8xf32>, vector<16x8xf32> -> vector<16x8xf32>
    %103 = vector.broadcast %101 : vector<16x1xf32> to vector<16x8xf32>
    %104 = arith.mulf %102, %103 : vector<16x8xf32>
    %105 = vector.extract_strided_slice %31 {offsets = [24, 0], sizes = [8, 32], strides = [1, 1]} : vector<32x32xf32> to vector<8x32xf32>
    %cst_38 = arith.constant dense<0.000000e+00> : vector<16x32xf32>
    %106 = tpu.matmul %104, %105, %cst_38 {dimension_numbers = #tpu.dot_dimension_numbers<[1], [0], [0], [1], [0, 0, 1, 1], [], []>} : vector<16x8xf32>, vector<8x32xf32>, vector<16x32xf32> -> vector<16x32xf32>
    %107 = arith.addf %88, %106 : vector<16x32xf32>
    %108 = vector.broadcast %32 : vector<1x32xf32> to vector<16x32xf32>
    %109 = arith.addf %107, %108 : vector<16x32xf32>
    %110 = arith.addf %0, %109 : vector<16x32xf32>
    %cst_39 = arith.constant dense<0.000000e+00> : vector<16xf32>
    %111 = vector.multi_reduction <add>, %110, %cst_39 [1] : vector<16x32xf32> to vector<16xf32>
    %112 = vector.shape_cast %111 : vector<16xf32> to vector<16x1xf32>
    %cst_40 = arith.constant 3.200000e+01 : f32
    %113 = vector.broadcast %cst_40 : f32 to vector<16x1xf32>
    %114 = arith.divf %112, %113 : vector<16x1xf32>
    %115 = vector.broadcast %114 : vector<16x1xf32> to vector<16x32xf32>
    %116 = arith.subf %110, %115 : vector<16x32xf32>
    %117 = arith.mulf %116, %116 : vector<16x32xf32>
    %cst_41 = arith.constant dense<0.000000e+00> : vector<16xf32>
    %118 = vector.multi_reduction <add>, %117, %cst_41 [1] : vector<16x32xf32> to vector<16xf32>
    %119 = vector.shape_cast %118 : vector<16xf32> to vector<16x1xf32>
    %cst_42 = arith.constant 0.0322580636 : f32
    %120 = vector.broadcast %cst_42 : f32 to vector<16x1xf32>
    %121 = arith.mulf %119, %120 : vector<16x1xf32>
    %122 = math.sqrt %121 : vector<16x1xf32>
    %c2 = arith.constant 2 : index
    %c0_43 = arith.constant 0 : index
    %123 = vector.load %arg4[%c2, %c0_43] : memref<13x128xf32, #tpu.memory_space<vmem>>, vector<1x32xf32>
    %124 = vector.broadcast %123 : vector<1x32xf32> to vector<16x32xf32>
    %125 = arith.mulf %124, %116 : vector<16x32xf32>
    %cst_44 = arith.constant 9.99999997E-7 : f32
    %126 = vector.broadcast %cst_44 : f32 to vector<16x1xf32>
    %127 = arith.addf %122, %126 : vector<16x1xf32>
    %128 = tpu.reciprocal %127 : vector<16x1xf32> -> vector<16x1xf32>
    %129 = vector.broadcast %128 : vector<16x1xf32> to vector<16x32xf32>
    %130 = arith.mulf %125, %129 : vector<16x32xf32>
    %c3 = arith.constant 3 : index
    %c0_45 = arith.constant 0 : index
    %131 = vector.load %arg4[%c3, %c0_45] : memref<13x128xf32, #tpu.memory_space<vmem>>, vector<1x32xf32>
    %132 = vector.broadcast %131 : vector<1x32xf32> to vector<16x32xf32>
    %133 = arith.addf %130, %132 : vector<16x32xf32>
    %c0_46 = arith.constant 0 : index
    %c0_47 = arith.constant 0 : index
    %134 = vector.load %arg7[%c0_46, %c0_47] : memref<32x32xf32, #tpu.memory_space<vmem>>, vector<32x32xf32>
    %cst_48 = arith.constant dense<0.000000e+00> : vector<16x32xf32>
    %135 = tpu.matmul %133, %134, %cst_48 {dimension_numbers = #tpu.dot_dimension_numbers<[1], [0], [0], [1], [0, 0, 1, 1], [], []>} : vector<16x32xf32>, vector<32x32xf32>, vector<16x32xf32> -> vector<16x32xf32>
    %c8 = arith.constant 8 : index
    %c0_49 = arith.constant 0 : index
    %136 = vector.load %arg4[%c8, %c0_49] : memref<13x128xf32, #tpu.memory_space<vmem>>, vector<1x32xf32>
    %137 = vector.broadcast %136 : vector<1x32xf32> to vector<16x32xf32>
    %138 = arith.addf %135, %137 : vector<16x32xf32>
    %c0_50 = arith.constant 0 : index
    %c0_51 = arith.constant 0 : index
    %139 = vector.load %arg8[%c0_50, %c0_51] : memref<32x64xf32, #tpu.memory_space<vmem>>, vector<32x64xf32>
    %cst_52 = arith.constant dense<0.000000e+00> : vector<16x64xf32>
    %140 = tpu.matmul %1, %139, %cst_52 {dimension_numbers = #tpu.dot_dimension_numbers<[1], [0], [0], [1], [0, 0, 1, 1], [], []>} : vector<16x32xf32>, vector<32x64xf32>, vector<16x64xf32> -> vector<16x64xf32>
    %c9 = arith.constant 9 : index
    %c0_53 = arith.constant 0 : index
    %141 = vector.load %arg4[%c9, %c0_53] : memref<13x128xf32, #tpu.memory_space<vmem>>, vector<1x64xf32>
    %142 = vector.broadcast %141 : vector<1x64xf32> to vector<16x64xf32>
    %143 = arith.addf %140, %142 : vector<16x64xf32>
    %c0_54 = arith.constant 0 : index
    %c0_55 = arith.constant 0 : index
    %144 = vector.load %arg3[%c0_54, %c0_55] : memref<16x16xf32, #tpu.memory_space<vmem>>, vector<16x16xf32>
    %c0_56 = arith.constant 0 : index
    %c0_57 = arith.constant 0 : index
    %145 = vector.load %arg9[%c0_56, %c0_57] : memref<32x32xf32, #tpu.memory_space<vmem>>, vector<32x32xf32>
    %c10 = arith.constant 10 : index
    %c0_58 = arith.constant 0 : index
    %146 = vector.load %arg4[%c10, %c0_58] : memref<13x128xf32, #tpu.memory_space<vmem>>, vector<1x32xf32>
    %147 = vector.extract_strided_slice %138 {offsets = [0, 0], sizes = [16, 8], strides = [1, 1]} : vector<16x32xf32> to vector<16x8xf32>
    %148 = vector.extract_strided_slice %143 {offsets = [0, 0], sizes = [16, 8], strides = [1, 1]} : vector<16x64xf32> to vector<16x8xf32>
    %149 = vector.extract_strided_slice %143 {offsets = [0, 32], sizes = [16, 8], strides = [1, 1]} : vector<16x64xf32> to vector<16x8xf32>
    %cst_59 = arith.constant dense<0.000000e+00> : vector<16x16xf32>
    %150 = tpu.matmul %147, %148, %cst_59 {dimension_numbers = #tpu.dot_dimension_numbers<[1], [1], [0], [0], [0, 0, 1, 0], [], []>} : vector<16x8xf32>, vector<16x8xf32>, vector<16x16xf32> -> vector<16x16xf32>
    %151 = arith.addf %150, %144 : vector<16x16xf32>
    %cst_60 = arith.constant dense<0xFF800000> : vector<16xf32>
    %152 = vector.multi_reduction <maximumf>, %151, %cst_60 [1] : vector<16x16xf32> to vector<16xf32>
    %153 = vector.shape_cast %152 : vector<16xf32> to vector<16x1xf32>
    %154 = vector.broadcast %153 : vector<16x1xf32> to vector<16x16xf32>
    %155 = arith.subf %151, %154 : vector<16x16xf32>
    %156 = math.exp %155 : vector<16x16xf32>
    %cst_61 = arith.constant dense<0.000000e+00> : vector<16xf32>
    %157 = vector.multi_reduction <add>, %156, %cst_61 [1] : vector<16x16xf32> to vector<16xf32>
    %158 = vector.shape_cast %157 : vector<16xf32> to vector<16x1xf32>
    %159 = tpu.reciprocal %158 : vector<16x1xf32> -> vector<16x1xf32>
    %cst_62 = arith.constant dense<0.000000e+00> : vector<16x8xf32>
    %160 = tpu.matmul %156, %149, %cst_62 {dimension_numbers = #tpu.dot_dimension_numbers<[1], [0], [0], [1], [0, 0, 1, 1], [], []>} : vector<16x16xf32>, vector<16x8xf32>, vector<16x8xf32> -> vector<16x8xf32>
    %161 = vector.broadcast %159 : vector<16x1xf32> to vector<16x8xf32>
    %162 = arith.mulf %160, %161 : vector<16x8xf32>
    %163 = vector.extract_strided_slice %145 {offsets = [0, 0], sizes = [8, 32], strides = [1, 1]} : vector<32x32xf32> to vector<8x32xf32>
    %cst_63 = arith.constant dense<0.000000e+00> : vector<16x32xf32>
    %164 = tpu.matmul %162, %163, %cst_63 {dimension_numbers = #tpu.dot_dimension_numbers<[1], [0], [0], [1], [0, 0, 1, 1], [], []>} : vector<16x8xf32>, vector<8x32xf32>, vector<16x32xf32> -> vector<16x32xf32>
    %165 = vector.extract_strided_slice %138 {offsets = [0, 8], sizes = [16, 8], strides = [1, 1]} : vector<16x32xf32> to vector<16x8xf32>
    %166 = vector.extract_strided_slice %143 {offsets = [0, 8], sizes = [16, 8], strides = [1, 1]} : vector<16x64xf32> to vector<16x8xf32>
    %167 = vector.extract_strided_slice %143 {offsets = [0, 40], sizes = [16, 8], strides = [1, 1]} : vector<16x64xf32> to vector<16x8xf32>
    %cst_64 = arith.constant dense<0.000000e+00> : vector<16x16xf32>
    %168 = tpu.matmul %165, %166, %cst_64 {dimension_numbers = #tpu.dot_dimension_numbers<[1], [1], [0], [0], [0, 0, 1, 0], [], []>} : vector<16x8xf32>, vector<16x8xf32>, vector<16x16xf32> -> vector<16x16xf32>
    %169 = arith.addf %168, %144 : vector<16x16xf32>
    %cst_65 = arith.constant dense<0xFF800000> : vector<16xf32>
    %170 = vector.multi_reduction <maximumf>, %169, %cst_65 [1] : vector<16x16xf32> to vector<16xf32>
    %171 = vector.shape_cast %170 : vector<16xf32> to vector<16x1xf32>
    %172 = vector.broadcast %171 : vector<16x1xf32> to vector<16x16xf32>
    %173 = arith.subf %169, %172 : vector<16x16xf32>
    %174 = math.exp %173 : vector<16x16xf32>
    %cst_66 = arith.constant dense<0.000000e+00> : vector<16xf32>
    %175 = vector.multi_reduction <add>, %174, %cst_66 [1] : vector<16x16xf32> to vector<16xf32>
    %176 = vector.shape_cast %175 : vector<16xf32> to vector<16x1xf32>
    %177 = tpu.reciprocal %176 : vector<16x1xf32> -> vector<16x1xf32>
    %cst_67 = arith.constant dense<0.000000e+00> : vector<16x8xf32>
    %178 = tpu.matmul %174, %167, %cst_67 {dimension_numbers = #tpu.dot_dimension_numbers<[1], [0], [0], [1], [0, 0, 1, 1], [], []>} : vector<16x16xf32>, vector<16x8xf32>, vector<16x8xf32> -> vector<16x8xf32>
    %179 = vector.broadcast %177 : vector<16x1xf32> to vector<16x8xf32>
    %180 = arith.mulf %178, %179 : vector<16x8xf32>
    %181 = vector.extract_strided_slice %145 {offsets = [8, 0], sizes = [8, 32], strides = [1, 1]} : vector<32x32xf32> to vector<8x32xf32>
    %cst_68 = arith.constant dense<0.000000e+00> : vector<16x32xf32>
    %182 = tpu.matmul %180, %181, %cst_68 {dimension_numbers = #tpu.dot_dimension_numbers<[1], [0], [0], [1], [0, 0, 1, 1], [], []>} : vector<16x8xf32>, vector<8x32xf32>, vector<16x32xf32> -> vector<16x32xf32>
    %183 = arith.addf %164, %182 : vector<16x32xf32>
    %184 = vector.extract_strided_slice %138 {offsets = [0, 16], sizes = [16, 8], strides = [1, 1]} : vector<16x32xf32> to vector<16x8xf32>
    %185 = vector.extract_strided_slice %143 {offsets = [0, 16], sizes = [16, 8], strides = [1, 1]} : vector<16x64xf32> to vector<16x8xf32>
    %186 = vector.extract_strided_slice %143 {offsets = [0, 48], sizes = [16, 8], strides = [1, 1]} : vector<16x64xf32> to vector<16x8xf32>
    %cst_69 = arith.constant dense<0.000000e+00> : vector<16x16xf32>
    %187 = tpu.matmul %184, %185, %cst_69 {dimension_numbers = #tpu.dot_dimension_numbers<[1], [1], [0], [0], [0, 0, 1, 0], [], []>} : vector<16x8xf32>, vector<16x8xf32>, vector<16x16xf32> -> vector<16x16xf32>
    %188 = arith.addf %187, %144 : vector<16x16xf32>
    %cst_70 = arith.constant dense<0xFF800000> : vector<16xf32>
    %189 = vector.multi_reduction <maximumf>, %188, %cst_70 [1] : vector<16x16xf32> to vector<16xf32>
    %190 = vector.shape_cast %189 : vector<16xf32> to vector<16x1xf32>
    %191 = vector.broadcast %190 : vector<16x1xf32> to vector<16x16xf32>
    %192 = arith.subf %188, %191 : vector<16x16xf32>
    %193 = math.exp %192 : vector<16x16xf32>
    %cst_71 = arith.constant dense<0.000000e+00> : vector<16xf32>
    %194 = vector.multi_reduction <add>, %193, %cst_71 [1] : vector<16x16xf32> to vector<16xf32>
    %195 = vector.shape_cast %194 : vector<16xf32> to vector<16x1xf32>
    %196 = tpu.reciprocal %195 : vector<16x1xf32> -> vector<16x1xf32>
    %cst_72 = arith.constant dense<0.000000e+00> : vector<16x8xf32>
    %197 = tpu.matmul %193, %186, %cst_72 {dimension_numbers = #tpu.dot_dimension_numbers<[1], [0], [0], [1], [0, 0, 1, 1], [], []>} : vector<16x16xf32>, vector<16x8xf32>, vector<16x8xf32> -> vector<16x8xf32>
    %198 = vector.broadcast %196 : vector<16x1xf32> to vector<16x8xf32>
    %199 = arith.mulf %197, %198 : vector<16x8xf32>
    %200 = vector.extract_strided_slice %145 {offsets = [16, 0], sizes = [8, 32], strides = [1, 1]} : vector<32x32xf32> to vector<8x32xf32>
    %cst_73 = arith.constant dense<0.000000e+00> : vector<16x32xf32>
    %201 = tpu.matmul %199, %200, %cst_73 {dimension_numbers = #tpu.dot_dimension_numbers<[1], [0], [0], [1], [0, 0, 1, 1], [], []>} : vector<16x8xf32>, vector<8x32xf32>, vector<16x32xf32> -> vector<16x32xf32>
    %202 = arith.addf %183, %201 : vector<16x32xf32>
    %203 = vector.extract_strided_slice %138 {offsets = [0, 24], sizes = [16, 8], strides = [1, 1]} : vector<16x32xf32> to vector<16x8xf32>
    %204 = vector.extract_strided_slice %143 {offsets = [0, 24], sizes = [16, 8], strides = [1, 1]} : vector<16x64xf32> to vector<16x8xf32>
    %205 = vector.extract_strided_slice %143 {offsets = [0, 56], sizes = [16, 8], strides = [1, 1]} : vector<16x64xf32> to vector<16x8xf32>
    %cst_74 = arith.constant dense<0.000000e+00> : vector<16x16xf32>
    %206 = tpu.matmul %203, %204, %cst_74 {dimension_numbers = #tpu.dot_dimension_numbers<[1], [1], [0], [0], [0, 0, 1, 0], [], []>} : vector<16x8xf32>, vector<16x8xf32>, vector<16x16xf32> -> vector<16x16xf32>
    %207 = arith.addf %206, %144 : vector<16x16xf32>
    %cst_75 = arith.constant dense<0xFF800000> : vector<16xf32>
    %208 = vector.multi_reduction <maximumf>, %207, %cst_75 [1] : vector<16x16xf32> to vector<16xf32>
    %209 = vector.shape_cast %208 : vector<16xf32> to vector<16x1xf32>
    %210 = vector.broadcast %209 : vector<16x1xf32> to vector<16x16xf32>
    %211 = arith.subf %207, %210 : vector<16x16xf32>
    %212 = math.exp %211 : vector<16x16xf32>
    %cst_76 = arith.constant dense<0.000000e+00> : vector<16xf32>
    %213 = vector.multi_reduction <add>, %212, %cst_76 [1] : vector<16x16xf32> to vector<16xf32>
    %214 = vector.shape_cast %213 : vector<16xf32> to vector<16x1xf32>
    %215 = tpu.reciprocal %214 : vector<16x1xf32> -> vector<16x1xf32>
    %cst_77 = arith.constant dense<0.000000e+00> : vector<16x8xf32>
    %216 = tpu.matmul %212, %205, %cst_77 {dimension_numbers = #tpu.dot_dimension_numbers<[1], [0], [0], [1], [0, 0, 1, 1], [], []>} : vector<16x16xf32>, vector<16x8xf32>, vector<16x8xf32> -> vector<16x8xf32>
    %217 = vector.broadcast %215 : vector<16x1xf32> to vector<16x8xf32>
    %218 = arith.mulf %216, %217 : vector<16x8xf32>
    %219 = vector.extract_strided_slice %145 {offsets = [24, 0], sizes = [8, 32], strides = [1, 1]} : vector<32x32xf32> to vector<8x32xf32>
    %cst_78 = arith.constant dense<0.000000e+00> : vector<16x32xf32>
    %220 = tpu.matmul %218, %219, %cst_78 {dimension_numbers = #tpu.dot_dimension_numbers<[1], [0], [0], [1], [0, 0, 1, 1], [], []>} : vector<16x8xf32>, vector<8x32xf32>, vector<16x32xf32> -> vector<16x32xf32>
    %221 = arith.addf %202, %220 : vector<16x32xf32>
    %222 = vector.broadcast %146 : vector<1x32xf32> to vector<16x32xf32>
    %223 = arith.addf %221, %222 : vector<16x32xf32>
    %224 = arith.addf %110, %223 : vector<16x32xf32>
    %cst_79 = arith.constant dense<0.000000e+00> : vector<16xf32>
    %225 = vector.multi_reduction <add>, %224, %cst_79 [1] : vector<16x32xf32> to vector<16xf32>
    %226 = vector.shape_cast %225 : vector<16xf32> to vector<16x1xf32>
    %cst_80 = arith.constant 3.200000e+01 : f32
    %227 = vector.broadcast %cst_80 : f32 to vector<16x1xf32>
    %228 = arith.divf %226, %227 : vector<16x1xf32>
    %229 = vector.broadcast %228 : vector<16x1xf32> to vector<16x32xf32>
    %230 = arith.subf %224, %229 : vector<16x32xf32>
    %231 = arith.mulf %230, %230 : vector<16x32xf32>
    %cst_81 = arith.constant dense<0.000000e+00> : vector<16xf32>
    %232 = vector.multi_reduction <add>, %231, %cst_81 [1] : vector<16x32xf32> to vector<16xf32>
    %233 = vector.shape_cast %232 : vector<16xf32> to vector<16x1xf32>
    %cst_82 = arith.constant 0.0322580636 : f32
    %234 = vector.broadcast %cst_82 : f32 to vector<16x1xf32>
    %235 = arith.mulf %233, %234 : vector<16x1xf32>
    %236 = math.sqrt %235 : vector<16x1xf32>
    %c4 = arith.constant 4 : index
    %c0_83 = arith.constant 0 : index
    %237 = vector.load %arg4[%c4, %c0_83] : memref<13x128xf32, #tpu.memory_space<vmem>>, vector<1x32xf32>
    %238 = vector.broadcast %237 : vector<1x32xf32> to vector<16x32xf32>
    %239 = arith.mulf %238, %230 : vector<16x32xf32>
    %cst_84 = arith.constant 9.99999997E-7 : f32
    %240 = vector.broadcast %cst_84 : f32 to vector<16x1xf32>
    %241 = arith.addf %236, %240 : vector<16x1xf32>
    %242 = tpu.reciprocal %241 : vector<16x1xf32> -> vector<16x1xf32>
    %243 = vector.broadcast %242 : vector<16x1xf32> to vector<16x32xf32>
    %244 = arith.mulf %239, %243 : vector<16x32xf32>
    %c5 = arith.constant 5 : index
    %c0_85 = arith.constant 0 : index
    %245 = vector.load %arg4[%c5, %c0_85] : memref<13x128xf32, #tpu.memory_space<vmem>>, vector<1x32xf32>
    %246 = vector.broadcast %245 : vector<1x32xf32> to vector<16x32xf32>
    %247 = arith.addf %244, %246 : vector<16x32xf32>
    %c0_86 = arith.constant 0 : index
    %c0_87 = arith.constant 0 : index
    %248 = vector.load %arg10[%c0_86, %c0_87] : memref<32x64xf32, #tpu.memory_space<vmem>>, vector<32x64xf32>
    %cst_88 = arith.constant dense<0.000000e+00> : vector<16x64xf32>
    %249 = tpu.matmul %247, %248, %cst_88 {dimension_numbers = #tpu.dot_dimension_numbers<[1], [0], [0], [1], [0, 0, 1, 1], [], []>} : vector<16x32xf32>, vector<32x64xf32>, vector<16x64xf32> -> vector<16x64xf32>
    %c11 = arith.constant 11 : index
    %c0_89 = arith.constant 0 : index
    %250 = vector.load %arg4[%c11, %c0_89] : memref<13x128xf32, #tpu.memory_space<vmem>>, vector<1x64xf32>
    %251 = vector.broadcast %250 : vector<1x64xf32> to vector<16x64xf32>
    %252 = arith.addf %249, %251 : vector<16x64xf32>
    %cst_90 = arith.constant 0.000000e+00 : f32
    %253 = vector.broadcast %cst_90 : f32 to vector<16x64xf32>
    %254 = arith.maximumf %252, %253 : vector<16x64xf32>
    %c0_91 = arith.constant 0 : index
    %c0_92 = arith.constant 0 : index
    %255 = vector.load %arg11[%c0_91, %c0_92] : memref<64x32xf32, #tpu.memory_space<vmem>>, vector<64x32xf32>
    %cst_93 = arith.constant dense<0.000000e+00> : vector<16x32xf32>
    %256 = tpu.matmul %254, %255, %cst_93 {dimension_numbers = #tpu.dot_dimension_numbers<[1], [0], [0], [1], [0, 0, 1, 1], [], []>} : vector<16x64xf32>, vector<64x32xf32>, vector<16x32xf32> -> vector<16x32xf32>
    %c12 = arith.constant 12 : index
    %c0_94 = arith.constant 0 : index
    %257 = vector.load %arg4[%c12, %c0_94] : memref<13x128xf32, #tpu.memory_space<vmem>>, vector<1x32xf32>
    %258 = vector.broadcast %257 : vector<1x32xf32> to vector<16x32xf32>
    %259 = arith.addf %256, %258 : vector<16x32xf32>
    %260 = arith.addf %224, %259 : vector<16x32xf32>
    %c0_95 = arith.constant 0 : index
    %c0_96 = arith.constant 0 : index
    %261 = vector.load %arg12[%c0_95, %c0_96] : memref<16x32xf32, #tpu.memory_space<vmem>>, vector<16x32xf32>
    tpu.vector_store %arg12[%c0_95, %c0_96], %260 {strides = array<i32>} : memref<16x32xf32, #tpu.memory_space<vmem>>, vector<16x32xf32>,
    return
  }
}

</mosaic_0001>

<llo_original>
// kernel: decoder_layer_forward.1
$region0: #{decoder_layer_forward.1}
  #allocation0 [shape = 'u32[]', space=smem, size = 0x4, offset = 0x4, fixed_abs, tag = 'smem constant byte address 0x4 - core index']
  #allocation1 [shape = 'u32[72,128]{1,0:T(1,128)}', space=vmem, size = 0x9000, scoped, tag = 'internal scratch']
  %s0 = inlined_call_operand.hbm [shape: f32[16,32], index: 0, kind: input, shape index: {}]
  %s1 = inlined_call_operand.hbm [shape: f32[16,32], index: 1, kind: input, shape index: {}]
  %s2 = inlined_call_operand.vmem [shape: f32[16,16], index: 2, kind: input, shape index: {}]
  %s3 = inlined_call_operand.vmem [shape: f32[16,16], index: 3, kind: input, shape index: {}]
  %s4 = inlined_call_operand.hbm [shape: f32[13,128], index: 4, kind: input, shape index: {}]
  %s5 = inlined_call_operand.vmem [shape: f32[32,96], index: 5, kind: input, shape index: {}]
  %s6 = inlined_call_operand.vmem [shape: f32[32,32], index: 6, kind: input, shape index: {}]
  %s7 = inlined_call_operand.vmem [shape: f32[32,32], index: 7, kind: input, shape index: {}]
  %s8 = inlined_call_operand.vmem [shape: f32[32,64], index: 8, kind: input, shape index: {}]
  %s9 = inlined_call_operand.vmem [shape: f32[32,32], index: 9, kind: input, shape index: {}]
  %s10 = inlined_call_operand.vmem [shape: f32[32,64], index: 10, kind: input, shape index: {}]
  %s11 = inlined_call_operand.vmem [shape: f32[64,32], index: 11, kind: input, shape index: {}]
  %s12 = inlined_call_operand.hbm [shape: f32[16,32], index: 12, kind: output, shape index: {}]
  %s13 = sld [smem:[#allocation0]]
  $region70: #{decoder_layer_forward.1} parent=0
    _
  %s15 = ssub.s32 1, %s13
  %s16 = scalar_select 0, %s15, %s13
  $region1: #{decoder_layer_forward.1} parent=0
    #allocation2 [shape = 'u8[8192]{0}', space=vmem, size = 0x2000, scoped, tag = 'input window, operand 0, single buffered']
    #allocation3 [shape = 's32[1]{0}', space=sflag, size = 0x4, scoped, tag = 'scoped memory for decoder_layer_forward.1']
    #allocation4 [shape = 's32[1]{0}', space=sflag, size = 0x4, scoped, tag = 'scoped memory for decoder_layer_forward.1']
    #allocation5 [shape = 'u8[8192]{0}', space=vmem, size = 0x2000, scoped, tag = 'input window, operand 1, single buffered']
    #allocation6 [shape = 's32[1]{0}', space=sflag, size = 0x4, scoped, tag = 'scoped memory for decoder_layer_forward.1']
    #allocation7 [shape = 'u8[8192]{0}', space=vmem, size = 0x2000, scoped, tag = 'input window, operand 4, single buffered']
    #allocation8 [shape = 'u8[8192]{0}', space=vmem, size = 0x2000, scoped, tag = 'output window, operand 0, single buffered']
    %17 = vsyncpa [#allocation3], 0
    %18 = vsyncpa [#allocation6], 0
    %19 = vsyncpa [#allocation4], 0
    // Predicated region
    $region2: #{decoder_layer_forward.1} parent=1 // pred_check
      _
    $region3: #{decoder_layer_forward.1} parent=1 // pred_check_branch
      %21 = sbr.rel (0) target = $region5
    $region4: #{decoder_layer_forward.1} parent=1 // pred_region
      %23 = vsyncadd [#allocation3], 0
      %s24 = sshll.u32 %s0, 4
      %s25 = int_to_ptr.hbm [resolvable:$true] %s24
      %s26 = sshll.u32 [#allocation2], 4
      %s27 = int_to_ptr.vmem [resolvable:$true] %s26
      %32 = dma.hbm_to_vmem [thread:$0]  %s25, 256, %s27, [#allocation3], 128, 128, 8
    $region5: #{decoder_layer_forward.1} parent=1 // pred_fallthru
      _
    // Predicated region
    $region6: #{decoder_layer_forward.1} parent=1 // pred_check
      _
    $region7: #{decoder_layer_forward.1} parent=1 // pred_check_branch
      %34 = sbr.rel (0) target = $region9
    $region8: #{decoder_layer_forward.1} parent=1 // pred_region
      %36 = vsyncadd [#allocation6], 0
      %s37 = sshll.u32 %s1, 4
      %s38 = int_to_ptr.hbm [resolvable:$true] %s37
      %s39 = sshll.u32 [#allocation5], 4
      %s40 = int_to_ptr.vmem [resolvable:$true] %s39
      %45 = dma.hbm_to_vmem [thread:$0]  %s38, 256, %s40, [#allocation6], 128, 128, 8
    $region9: #{decoder_layer_forward.1} parent=1 // pred_fallthru
      _
    // Predicated region
    $region10: #{decoder_layer_forward.1} parent=1 // pred_check
      _
    $region11: #{decoder_layer_forward.1} parent=1 // pred_check_branch
      %47 = sbr.rel (0) target = $region13
    $region12: #{decoder_layer_forward.1} parent=1 // pred_region
      _
    $region13: #{decoder_layer_forward.1} parent=1 // pred_fallthru
      _
    // Predicated region
    $region14: #{decoder_layer_forward.1} parent=1 // pred_check
      _
    $region15: #{decoder_layer_forward.1} parent=1 // pred_check_branch
      %49 = sbr.rel (0) target = $region17
    $region16: #{decoder_layer_forward.1} parent=1 // pred_region
      _
    $region17: #{decoder_layer_forward.1} parent=1 // pred_fallthru
      _
    // Predicated region
    $region18: #{decoder_layer_forward.1} parent=1 // pred_check
      _
    $region19: #{decoder_layer_forward.1} parent=1 // pred_check_branch
      %51 = sbr.rel (0) target = $region21
    $region20: #{decoder_layer_forward.1} parent=1 // pred_region
      %53 = vsyncadd [#allocation6], 0
      %s54 = sshll.u32 %s4, 4
      %s55 = int_to_ptr.hbm [resolvable:$true] %s54
      %s56 = sshll.u32 [#allocation7], 4
      %s57 = int_to_ptr.vmem [resolvable:$true] %s56
      %62 = dma.hbm_to_vmem [thread:$0]  %s55, 256, %s57, [#allocation6], 128, 128, 8
    $region21: #{decoder_layer_forward.1} parent=1 // pred_fallthru
      _
    // Predicated region
    $region22: #{decoder_layer_forward.1} parent=1 // pred_check
      _
    $region23: #{decoder_layer_forward.1} parent=1 // pred_check_branch
      %64 = sbr.rel (0) target = $region25
    $region24: #{decoder_layer_forward.1} parent=1 // pred_region
      _
    $region25: #{decoder_layer_forward.1} parent=1 // pred_fallthru
      _
    // Predicated region
    $region26: #{decoder_layer_forward.1} parent=1 // pred_check
      _
    $region27: #{decoder_layer_forward.1} parent=1 // pred_check_branch
      %66 = sbr.rel (0) target = $region29
    $region28: #{decoder_layer_forward.1} parent=1 // pred_region
      _
    $region29: #{decoder_layer_forward.1} parent=1 // pred_fallthru
      _
    // Predicated region
    $region30: #{decoder_layer_forward.1} parent=1 // pred_check
      _
    $region31: #{decoder_layer_forward.1} parent=1 // pred_check_branch
      %68 = sbr.rel (0) target = $region33
    $region32: #{decoder_layer_forward.1} parent=1 // pred_region
      _
    $region33: #{decoder_layer_forward.1} parent=1 // pred_fallthru
      _
    // Predicated region
    $region34: #{decoder_layer_forward.1} parent=1 // pred_check
      _
    $region35: #{decoder_layer_forward.1} parent=1 // pred_check_branch
      %70 = sbr.rel (0) target = $region37
    $region36: #{decoder_layer_forward.1} parent=1 // pred_region
      _
    $region37: #{decoder_layer_forward.1} parent=1 // pred_fallthru
      _
    // Predicated region
    $region38: #{decoder_layer_forward.1} parent=1 // pred_check
      _
    $region39: #{decoder_layer_forward.1} parent=1 // pred_check_branch
      %72 = sbr.rel (0) target = $region41
    $region40: #{decoder_layer_forward.1} parent=1 // pred_region
      _
    $region41: #{decoder_layer_forward.1} parent=1 // pred_fallthru
      _
    // Predicated region
    $region42: #{decoder_layer_forward.1} parent=1 // pred_check
      _
    $region43: #{decoder_layer_forward.1} parent=1 // pred_check_branch
      %74 = sbr.rel (0) target = $region45
    $region44: #{decoder_layer_forward.1} parent=1 // pred_region
      _
    $region45: #{decoder_layer_forward.1} parent=1 // pred_fallthru
      _
    // Predicated region
    $region46: #{decoder_layer_forward.1} parent=1 // pred_check
      _
    $region47: #{decoder_layer_forward.1} parent=1 // pred_check_branch
      %76 = sbr.rel (0) target = $region49
    $region48: #{decoder_layer_forward.1} parent=1 // pred_region
      _
    $region49: #{decoder_layer_forward.1} parent=1 // pred_fallthru
      _
    // Predicated region
    $region50: #{decoder_layer_forward.1} parent=1 // pred_check
      _
    $region51: #{decoder_layer_forward.1} parent=1 // pred_check_branch
      %78 = sbr.rel (0) target = $region53
    $region52: #{decoder_layer_forward.1} parent=1 // pred_region
      %80 = dma.done [#allocation3], 256
    $region53: #{decoder_layer_forward.1} parent=1 // pred_fallthru
      _
    // Predicated region
    $region54: #{decoder_layer_forward.1} parent=1 // pred_check
      _
    $region55: #{decoder_layer_forward.1} parent=1 // pred_check_branch
      %82 = sbr.rel (0) target = $region57
    $region56: #{decoder_layer_forward.1} parent=1 // pred_region
      %84 = dma.done [#allocation6], 256
    $region57: #{decoder_layer_forward.1} parent=1 // pred_fallthru
      _
    // Predicated region
    $region58: #{decoder_layer_forward.1} parent=1 // pred_check
      _
    $region59: #{decoder_layer_forward.1} parent=1 // pred_check_branch
      %86 = sbr.rel (0) target = $region61
    $region60: #{decoder_layer_forward.1} parent=1 // pred_region
      %88 = dma.done [#allocation6], 256
    $region61: #{decoder_layer_forward.1} parent=1 // pred_fallthru
      _
    %v89 = vld [vmem:[#allocation2] sm:$0xff]
    %v90 = vld [vmem:[#allocation2 + $0x8] sm:$0xff]
    %v91 = vld [vmem:[#allocation5] sm:$0xff]
    %v92 = vld [vmem:[#allocation5 + $0x8] sm:$0xff]
    %vm93 = vcmask 261120
    %v94 = vsel %vm93, %v89, 0.0
    %95 = vadd.xlane.f32.xlu0 %v94
    %v96 = vpop.xlane.xlu0 %95
    %v97 = vsel %vm93, %v90, 0.0
    %98 = vadd.xlane.f32.xlu0 %v97
    %v99 = vpop.xlane.xlu0 %98
    %v100 = vrcp.pop 32.0
    %v101 = vmul.f32 32.0, %v100
    %v102 = vsub.f32 1.0, %v101
    %v103 = vmul.f32 %v100, %v102
    %v104 = vadd.f32 %v100, %v103
    %vm105 = vweird.f32 %v100
    %v106 = vsel %vm105, %v100, %v104
    %v107 = vmul.f32 %v96, %v106
    %v108 = vmul.f32 %v99, %v106
    %v109 = vsub.f32 %v89, %v107
    %v110 = vsub.f32 %v90, %v108
    %v111 = vmul.f32 %v109, %v109
    %v112 = vmul.f32 %v110, %v110
    %v113 = vsel %vm93, %v111, 0.0
    %114 = vadd.xlane.f32.xlu0 %v113
    %v115 = vpop.xlane.xlu0 %114
    %v116 = vsel %vm93, %v112, 0.0
    %117 = vadd.xlane.f32.xlu0 %v116
    %v118 = vpop.xlane.xlu0 %117
    %v119 = vmul.f32 %v115, 0.032258064
    %v120 = vmul.f32 %v118, 0.032258064
    %v121 = vrsqrt.pop %v119
    %v122 = vmul.f32 %v121, %v119
    %v123 = vmul.f32 %v122, %v121
    %v124 = vmul.f32 0.5, %v123
    %v125 = vsub.f32 1.5, %v124
    %v126 = vmul.f32 %v121, %v125
    %v127 = vmul.f32 %v119, %v126
    %vm128 = vcmp.eq.f32.partialorder %v119, inf
    %v129 = vsel %vm128, %v119, %v127
    %vm130 = vcmp.eq.f32.partialorder %v119, 0.0
    %v131 = vand.u32 %v119, 2147483648
    %v132 = vsel %vm130, %v131, %v129
    %v133 = vrsqrt.pop %v120
    %v134 = vmul.f32 %v133, %v120
    %v135 = vmul.f32 %v134, %v133
    %v136 = vmul.f32 0.5, %v135
    %v137 = vsub.f32 1.5, %v136
    %v138 = vmul.f32 %v133, %v137
    %v139 = vmul.f32 %v120, %v138
    %vm140 = vcmp.eq.f32.partialorder %v120, inf
    %v141 = vsel %vm140, %v120, %v139
    %vm142 = vcmp.eq.f32.partialorder %v120, 0.0
    %v143 = vand.u32 %v120, 2147483648
    %v144 = vsel %vm142, %v143, %v141
    %v145 = vld [vmem:[#allocation7] sm:$0x1]
    %v146 = vperm.slane %v145, 0
    %v147 = vmul.f32 %v146, %v109
    %v148 = vmul.f32 %v146, %v110
    %v149 = vadd.f32 %v132, 1e-06
    %v150 = vadd.f32 %v144, 1e-06
    %v151 = vrcp.pop %v149
    %v152 = vmul.f32 %v149, %v151
    %v153 = vsub.f32 1.0, %v152
    %v154 = vmul.f32 %v151, %v153
    %v155 = vadd.f32 %v151, %v154
    %vm156 = vweird.f32 %v149
    %vm157 = vweird.f32 %v151
    %vm158 = vmor %vm156, %vm157
    %v159 = vsel %vm158, %v151, %v155
    %v160 = vand.u32 2147483647, %v149
    %vm161 = vcmp.eq.f32.partialorder %v160, 8.507059e+37
    %v162 = vand.u32 %v149, 2147483648
    %v163 = vor.u32 1.1754944e-38, %v162
    %v164 = vsel %vm161, %v163, %v159
    %v165 = vrcp.pop %v150
    %v166 = vmul.f32 %v150, %v165
    %v167 = vsub.f32 1.0, %v166
    %v168 = vmul.f32 %v165, %v167
    %v169 = vadd.f32 %v165, %v168
    %vm170 = vweird.f32 %v150
    %vm171 = vweird.f32 %v165
    %vm172 = vmor %vm170, %vm171
    %v173 = vsel %vm172, %v165, %v169
    %v174 = vand.u32 2147483647, %v150
    %vm175 = vcmp.eq.f32.partialorder %v174, 8.507059e+37
    %v176 = vand.u32 %v150, 2147483648
    %v177 = vor.u32 1.1754944e-38, %v176
    %v178 = vsel %vm175, %v177, %v173
    %v179 = vmul.f32 %v147, %v164
    %v180 = vmul.f32 %v148, %v178
    %v181 = vld [vmem:[#allocation7 + $0x1] sm:$0x1]
    %v182 = vperm.slane %v181, 0
    %v183 = vadd.f32 %v179, %v182
    %v184 = vadd.f32 %v180, %v182
    %v185 = vld [vmem:[%s5] sm:$0xff]
    %v186 = vld [vmem:[%s5 + $0x8] sm:$0xff]
    %v187 = vld [vmem:[%s5 + $0x10] sm:$0xff]
    %v188 = vld [vmem:[%s5 + $0x18] sm:$0xff]
    %v189 = vld [vmem:[#allocation7 + $0x6] sm:$0x1]
    %v190 = vperm.slane %v189, 0
    %v192 = vsel %vm93, %v183, 0
    %v195 = vsel %vm93, %v184, 0
    %197 = vmatpush.msra.mxu0 0.0
    %198 = vmatpush.msra.mxu0 0.0
    %199 = vmatpush.msra.mxu0 0.0
    %200 = vmatpush.msra.mxu0 0.0
    %201 = vmatpush.msra.mxu0 0.0
    %202 = vmatpush.msra.mxu0 0.0
    %203 = vmatpush.msra.mxu0 0.0
    %204 = vmatpush.msra.mxu0 0.0
    %205 = vmatpush.msra.mxu0 0.0
    %206 = vmatpush.msra.mxu0 0.0
    %207 = vmatpush.msra.mxu0 0.0
    %208 = vmatpush.msra.mxu0 0.0
    %209 = vmatpush.msra.mxu0 %v188
    %210 = vmatpush.msra.mxu0 %v187
    %211 = vmatpush.msra.mxu0 %v186
    %212 = vmatpush.msra.mxu0 %v185
    %213 = vmatmul.f32.gmra.mxu0 %v192
    %v214 = vpop.f32.mrf.mxu0
    %v215 = vadd.f32 %v190, %v214
    %216 = vmatmul.f32.gmra.mxu0 %v195
    %v217 = vpop.f32.mrf.mxu0
    %v218 = vadd.f32 %v190, %v217
    %219 = vdwg.mxu0
    %v220 = vld [vmem:[%s2] sm:$0xff]
    %v221 = vld [vmem:[%s2 + $0x8] sm:$0xff]
    %v222 = vld [vmem:[%s6] sm:$0xff]
    %v223 = vld [vmem:[%s6 + $0x8] sm:$0xff]
    %v224 = vld [vmem:[%s6 + $0x10] sm:$0xff]
    %v225 = vld [vmem:[%s6 + $0x18] sm:$0xff]
    %v226 = vld [vmem:[#allocation7 + $0x7] sm:$0x1]
    %229 = vrot.lane.b32.xlu0 %v215, 96
    %v230 = vpop.permute.xlu0 %229
    %231 = vrot.lane.b32.xlu0 %v218, 96
    %v232 = vpop.permute.xlu0 %231
    %vm233 = vcmask 64512
    %v234 = vsel %vm233, %v215, 0
    %v236 = vsel %vm233, %v218, 0
    %v238 = vsel %vm233, %v230, 0
    %v240 = vsel %vm233, %v232, 0
    %242 = vmatpush.xpose.msra.mxu0 0.0
    %243 = vmatpush.xpose.msra.mxu0 0.0
    %244 = vmatpush.xpose.msra.mxu0 0.0
    %245 = vmatpush.xpose.msra.mxu0 0.0
    %246 = vmatpush.xpose.msra.mxu0 0.0
    %247 = vmatpush.xpose.msra.mxu0 0.0
    %248 = vmatpush.xpose.msra.mxu0 0.0
    %249 = vmatpush.xpose.msra.mxu0 0.0
    %250 = vmatpush.xpose.msra.mxu0 0.0
    %251 = vmatpush.xpose.msra.mxu0 0.0
    %252 = vmatpush.xpose.msra.mxu0 0.0
    %253 = vmatpush.xpose.msra.mxu0 0.0
    %254 = vmatpush.xpose.msra.mxu0 0.0
    %255 = vmatpush.xpose.msra.mxu0 0.0
    %256 = vmatpush.xpose.msra.mxu0 %v240
    %257 = vmatpush.xpose.msra.mxu0 %v238
    %258 = vmatmul.f32.gmra.mxu0 %v234
    %v259 = vpop.f32.mrf.mxu0
    %v260 = vadd.f32 %v220, %v259
    %261 = vmatmul.f32.gmra.mxu0 %v236
    %v262 = vpop.f32.mrf.mxu0
    %v263 = vadd.f32 %v221, %v262
    %264 = vdwg.mxu0
    %vm265 = vcmask 130048
    %v266 = vsel %vm265, %v260, -inf
    %267 = vmax.xlane.f32.xlu0 %v266
    %v268 = vpop.xlane.xlu0 %267
    %v269 = vsel %vm265, %v263, -inf
    %270 = vmax.xlane.f32.xlu0 %v269
    %v271 = vpop.xlane.xlu0 %270
    %v272 = vsub.f32 %v260, %v268
    %v273 = vsub.f32 %v263, %v271
    %v274 = vmul.f32 %v272, 1.442695
    %v275 = vpow.pop %v274
    %v276 = vmul.f32 %v273, 1.442695
    %v277 = vpow.pop %v276
    %v278 = vsel %vm265, %v275, 0.0
    %279 = vadd.xlane.f32.xlu0 %v278
    %v280 = vpop.xlane.xlu0 %279
    %v281 = vsel %vm265, %v277, 0.0
    %282 = vadd.xlane.f32.xlu0 %v281
    %v283 = vpop.xlane.xlu0 %282
    %v284 = vrcp.pop %v280
    %v285 = vmul.f32 %v280, %v284
    %v286 = vsub.f32 1.0, %v285
    %v287 = vmul.f32 %v284, %v286
    %v288 = vadd.f32 %v284, %v287
    %vm289 = vweird.f32 %v280
    %vm290 = vweird.f32 %v284
    %vm291 = vmor %vm289, %vm290
    %v292 = vsel %vm291, %v284, %v288
    %v293 = vand.u32 2147483647, %v280
    %vm294 = vcmp.eq.f32.partialorder %v293, 8.507059e+37
    %v295 = vand.u32 %v280, 2147483648
    %v296 = vor.u32 1.1754944e-38, %v295
    %v297 = vsel %vm294, %v296, %v292
    %v298 = vrcp.pop %v283
    %v299 = vmul.f32 %v283, %v298
    %v300 = vsub.f32 1.0, %v299
    %v301 = vmul.f32 %v298, %v300
    %v302 = vadd.f32 %v298, %v301
    %vm303 = vweird.f32 %v283
    %vm304 = vweird.f32 %v298
    %vm305 = vmor %vm303, %vm304
    %v306 = vsel %vm305, %v298, %v302
    %v307 = vand.u32 2147483647, %v283
    %vm308 = vcmp.eq.f32.partialorder %v307, 8.507059e+37
    %v309 = vand.u32 %v283, 2147483648
    %v310 = vor.u32 1.1754944e-38, %v309
    %v311 = vsel %vm308, %v310, %v306
    %312 = vrot.lane.b32.xlu0 %v215, 64
    %v313 = vpop.permute.xlu0 %312
    %314 = vrot.lane.b32.xlu0 %v218, 64
    %v315 = vpop.permute.xlu0 %314
    %v319 = vsel %vm265, %v275, 0
    %v322 = vsel %vm265, %v277, 0
    %324 = vmatpush.msra.mxu0 0.0
    %325 = vmatpush.msra.mxu0 0.0
    %326 = vmatpush.msra.mxu0 0.0
    %327 = vmatpush.msra.mxu0 0.0
    %328 = vmatpush.msra.mxu0 0.0
    %329 = vmatpush.msra.mxu0 0.0
    %330 = vmatpush.msra.mxu0 0.0
    %331 = vmatpush.msra.mxu0 0.0
    %332 = vmatpush.msra.mxu0 0.0
    %333 = vmatpush.msra.mxu0 0.0
    %334 = vmatpush.msra.mxu0 0.0
    %335 = vmatpush.msra.mxu0 0.0
    %336 = vmatpush.msra.mxu0 0.0
    %337 = vmatpush.msra.mxu0 0.0
    %338 = vmatpush.msra.mxu0 %v315
    %339 = vmatpush.msra.mxu0 %v313
    %340 = vmatmul.f32.gmra.mxu0 %v319
    %v341 = vpop.f32.mrf.mxu0
    %v342 = vadd.f32 0.0, %v341
    %343 = vmatmul.f32.gmra.mxu0 %v322
    %v344 = vpop.f32.mrf.mxu0
    %v345 = vadd.f32 0.0, %v344
    %346 = vdwg.mxu0
    %v347 = vmul.f32 %v342, %v297
    %v348 = vmul.f32 %v345, %v311
    %349 = vrot.lane.b32.xlu0 %v215, 120
    %v350 = vpop.permute.xlu0 %349
    %351 = vrot.lane.b32.xlu0 %v218, 120
    %v352 = vpop.permute.xlu0 %351
    %353 = vrot.lane.b32.xlu0 %v215, 88
    %v354 = vpop.permute.xlu0 %353
    %355 = vrot.lane.b32.xlu0 %v218, 88
    %v356 = vpop.permute.xlu0 %355
    %v357 = vsel %vm233, %v350, 0
    %v359 = vsel %vm233, %v352, 0
    %v361 = vsel %vm233, %v354, 0
    %v363 = vsel %vm233, %v356, 0
    %365 = vmatpush.xpose.msra.mxu0 0.0
    %366 = vmatpush.xpose.msra.mxu0 0.0
    %367 = vmatpush.xpose.msra.mxu0 0.0
    %368 = vmatpush.xpose.msra.mxu0 0.0
    %369 = vmatpush.xpose.msra.mxu0 0.0
    %370 = vmatpush.xpose.msra.mxu0 0.0
    %371 = vmatpush.xpose.msra.mxu0 0.0
    %372 = vmatpush.xpose.msra.mxu0 0.0
    %373 = vmatpush.xpose.msra.mxu0 0.0
    %374 = vmatpush.xpose.msra.mxu0 0.0
    %375 = vmatpush.xpose.msra.mxu0 0.0
    %376 = vmatpush.xpose.msra.mxu0 0.0
    %377 = vmatpush.xpose.msra.mxu0 0.0
    %378 = vmatpush.xpose.msra.mxu0 0.0
    %379 = vmatpush.xpose.msra.mxu0 %v363
    %380 = vmatpush.xpose.msra.mxu0 %v361
    %381 = vmatmul.f32.gmra.mxu0 %v357
    %v382 = vpop.f32.mrf.mxu0
    %v383 = vadd.f32 %v220, %v382
    %384 = vmatmul.f32.gmra.mxu0 %v359
    %v385 = vpop.f32.mrf.mxu0
    %v386 = vadd.f32 %v221, %v385
    %387 = vdwg.mxu0
    %v388 = vsel %vm265, %v383, -inf
    %389 = vmax.xlane.f32.xlu0 %v388
    %v390 = vpop.xlane.xlu0 %389
    %v391 = vsel %vm265, %v386, -inf
    %392 = vmax.xlane.f32.xlu0 %v391
    %v393 = vpop.xlane.xlu0 %392
    %v394 = vsub.f32 %v383, %v390
    %v395 = vsub.f32 %v386, %v393
    %v396 = vmul.f32 %v394, 1.442695
    %v397 = vpow.pop %v396
    %v398 = vmul.f32 %v395, 1.442695
    %v399 = vpow.pop %v398
    %v400 = vsel %vm265, %v397, 0.0
    %401 = vadd.xlane.f32.xlu0 %v400
    %v402 = vpop.xlane.xlu0 %401
    %v403 = vsel %vm265, %v399, 0.0
    %404 = vadd.xlane.f32.xlu0 %v403
    %v405 = vpop.xlane.xlu0 %404
    %v406 = vrcp.pop %v402
    %v407 = vmul.f32 %v402, %v406
    %v408 = vsub.f32 1.0, %v407
    %v409 = vmul.f32 %v406, %v408
    %v410 = vadd.f32 %v406, %v409
    %vm411 = vweird.f32 %v402
    %vm412 = vweird.f32 %v406
    %vm413 = vmor %vm411, %vm412
    %v414 = vsel %vm413, %v406, %v410
    %v415 = vand.u32 2147483647, %v402
    %vm416 = vcmp.eq.f32.partialorder %v415, 8.507059e+37
    %v417 = vand.u32 %v402, 2147483648
    %v418 = vor.u32 1.1754944e-38, %v417
    %v419 = vsel %vm416, %v418, %v414
    %v420 = vrcp.pop %v405
    %v421 = vmul.f32 %v405, %v420
    %v422 = vsub.f32 1.0, %v421
    %v423 = vmul.f32 %v420, %v422
    %v424 = vadd.f32 %v420, %v423
    %vm425 = vweird.f32 %v405
    %vm426 = vweird.f32 %v420
    %vm427 = vmor %vm425, %vm426
    %v428 = vsel %vm427, %v420, %v424
    %v429 = vand.u32 2147483647, %v405
    %vm430 = vcmp.eq.f32.partialorder %v429, 8.507059e+37
    %v431 = vand.u32 %v405, 2147483648
    %v432 = vor.u32 1.1754944e-38, %v431
    %v433 = vsel %vm430, %v432, %v428
    %434 = vrot.lane.b32.xlu0 %v215, 56
    %v435 = vpop.permute.xlu0 %434
    %436 = vrot.lane.b32.xlu0 %v218, 56
    %v437 = vpop.permute.xlu0 %436
    %v441 = vsel %vm265, %v397, 0
    %v444 = vsel %vm265, %v399, 0
    %446 = vmatpush.msra.mxu0 0.0
    %447 = vmatpush.msra.mxu0 0.0
    %448 = vmatpush.msra.mxu0 0.0
    %449 = vmatpush.msra.mxu0 0.0
    %450 = vmatpush.msra.mxu0 0.0
    %451 = vmatpush.msra.mxu0 0.0
    %452 = vmatpush.msra.mxu0 0.0
    %453 = vmatpush.msra.mxu0 0.0
    %454 = vmatpush.msra.mxu0 0.0
    %455 = vmatpush.msra.mxu0 0.0
    %456 = vmatpush.msra.mxu0 0.0
    %457 = vmatpush.msra.mxu0 0.0
    %458 = vmatpush.msra.mxu0 0.0
    %459 = vmatpush.msra.mxu0 0.0
    %460 = vmatpush.msra.mxu0 %v437
    %461 = vmatpush.msra.mxu0 %v435
    %462 = vmatmul.f32.gmra.mxu0 %v441
    %v463 = vpop.f32.mrf.mxu0
    %v464 = vadd.f32 0.0, %v463
    %465 = vmatmul.f32.gmra.mxu0 %v444
    %v466 = vpop.f32.mrf.mxu0
    %v467 = vadd.f32 0.0, %v466
    %468 = vdwg.mxu0
    %v469 = vmul.f32 %v464, %v419
    %v470 = vmul.f32 %v467, %v433
    %v472 = vsel %vm233, %v469, 0
    %v475 = vsel %vm233, %v470, 0
    %477 = vmatpush.msra.mxu0 0.0
    %478 = vmatpush.msra.mxu0 0.0
    %479 = vmatpush.msra.mxu0 0.0
    %480 = vmatpush.msra.mxu0 0.0
    %481 = vmatpush.msra.mxu0 0.0
    %482 = vmatpush.msra.mxu0 0.0
    %483 = vmatpush.msra.mxu0 0.0
    %484 = vmatpush.msra.mxu0 0.0
    %485 = vmatpush.msra.mxu0 0.0
    %486 = vmatpush.msra.mxu0 0.0
    %487 = vmatpush.msra.mxu0 0.0
    %488 = vmatpush.msra.mxu0 0.0
    %489 = vmatpush.msra.mxu0 0.0
    %490 = vmatpush.msra.mxu0 0.0
    %491 = vmatpush.msra.mxu0 0.0
    %492 = vmatpush.msra.mxu0 %v223
    %493 = vmatmul.f32.gmra.mxu0 %v472
    %v494 = vpop.f32.mrf.mxu0
    %v495 = vadd.f32 0.0, %v494
    %496 = vmatmul.f32.gmra.mxu0 %v475
    %v497 = vpop.f32.mrf.mxu0
    %v498 = vadd.f32 0.0, %v497
    %499 = vdwg.mxu0
    %v501 = vsel %vm233, %v347, 0
    %v504 = vsel %vm233, %v348, 0
    %506 = vmatpush.msra.mxu0 0.0
    %507 = vmatpush.msra.mxu0 0.0
    %508 = vmatpush.msra.mxu0 0.0
    %509 = vmatpush.msra.mxu0 0.0
    %510 = vmatpush.msra.mxu0 0.0
    %511 = vmatpush.msra.mxu0 0.0
    %512 = vmatpush.msra.mxu0 0.0
    %513 = vmatpush.msra.mxu0 0.0
    %514 = vmatpush.msra.mxu0 0.0
    %515 = vmatpush.msra.mxu0 0.0
    %516 = vmatpush.msra.mxu0 0.0
    %517 = vmatpush.msra.mxu0 0.0
    %518 = vmatpush.msra.mxu0 0.0
    %519 = vmatpush.msra.mxu0 0.0
    %520 = vmatpush.msra.mxu0 0.0
    %521 = vmatpush.msra.mxu0 %v222
    %522 = vmatmul.f32.gmra.mxu0 %v501
    %v523 = vpop.f32.mrf.mxu0
    %v524 = vadd.f32 %v495, %v523
    %525 = vmatmul.f32.gmra.mxu0 %v504
    %v526 = vpop.f32.mrf.mxu0
    %v527 = vadd.f32 %v498, %v526
    %528 = vdwg.mxu0
    %529 = vrot.lane.b32.xlu0 %v215, 112
    %v530 = vpop.permute.xlu0 %529
    %531 = vrot.lane.b32.xlu0 %v218, 112
    %v532 = vpop.permute.xlu0 %531
    %533 = vrot.lane.b32.xlu0 %v215, 80
    %v534 = vpop.permute.xlu0 %533
    %535 = vrot.lane.b32.xlu0 %v218, 80
    %v536 = vpop.permute.xlu0 %535
    %v537 = vsel %vm233, %v530, 0
    %v539 = vsel %vm233, %v532, 0
    %v541 = vsel %vm233, %v534, 0
    %v543 = vsel %vm233, %v536, 0
    %545 = vmatpush.xpose.msra.mxu0 0.0
    %546 = vmatpush.xpose.msra.mxu0 0.0
    %547 = vmatpush.xpose.msra.mxu0 0.0
    %548 = vmatpush.xpose.msra.mxu0 0.0
    %549 = vmatpush.xpose.msra.mxu0 0.0
    %550 = vmatpush.xpose.msra.mxu0 0.0
    %551 = vmatpush.xpose.msra.mxu0 0.0
    %552 = vmatpush.xpose.msra.mxu0 0.0
    %553 = vmatpush.xpose.msra.mxu0 0.0
    %554 = vmatpush.xpose.msra.mxu0 0.0
    %555 = vmatpush.xpose.msra.mxu0 0.0
    %556 = vmatpush.xpose.msra.mxu0 0.0
    %557 = vmatpush.xpose.msra.mxu0 0.0
    %558 = vmatpush.xpose.msra.mxu0 0.0
    %559 = vmatpush.xpose.msra.mxu0 %v543
    %560 = vmatpush.xpose.msra.mxu0 %v541
    %561 = vmatmul.f32.gmra.mxu0 %v537
    %v562 = vpop.f32.mrf.mxu0
    %v563 = vadd.f32 %v220, %v562
    %564 = vmatmul.f32.gmra.mxu0 %v539
    %v565 = vpop.f32.mrf.mxu0
    %v566 = vadd.f32 %v221, %v565
    %567 = vdwg.mxu0
    %v568 = vsel %vm265, %v563, -inf
    %569 = vmax.xlane.f32.xlu0 %v568
    %v570 = vpop.xlane.xlu0 %569
    %v571 = vsel %vm265, %v566, -inf
    %572 = vmax.xlane.f32.xlu0 %v571
    %v573 = vpop.xlane.xlu0 %572
    %v574 = vsub.f32 %v563, %v570
    %v575 = vsub.f32 %v566, %v573
    %v576 = vmul.f32 %v574, 1.442695
    %v577 = vpow.pop %v576
    %v578 = vmul.f32 %v575, 1.442695
    %v579 = vpow.pop %v578
    %v580 = vsel %vm265, %v577, 0.0
    %581 = vadd.xlane.f32.xlu0 %v580
    %v582 = vpop.xlane.xlu0 %581
    %v583 = vsel %vm265, %v579, 0.0
    %584 = vadd.xlane.f32.xlu0 %v583
    %v585 = vpop.xlane.xlu0 %584
    %v586 = vrcp.pop %v582
    %v587 = vmul.f32 %v582, %v586
    %v588 = vsub.f32 1.0, %v587
    %v589 = vmul.f32 %v586, %v588
    %v590 = vadd.f32 %v586, %v589
    %vm591 = vweird.f32 %v582
    %vm592 = vweird.f32 %v586
    %vm593 = vmor %vm591, %vm592
    %v594 = vsel %vm593, %v586, %v590
    %v595 = vand.u32 2147483647, %v582
    %vm596 = vcmp.eq.f32.partialorder %v595, 8.507059e+37
    %v597 = vand.u32 %v582, 2147483648
    %v598 = vor.u32 1.1754944e-38, %v597
    %v599 = vsel %vm596, %v598, %v594
    %v600 = vrcp.pop %v585
    %v601 = vmul.f32 %v585, %v600
    %v602 = vsub.f32 1.0, %v601
    %v603 = vmul.f32 %v600, %v602
    %v604 = vadd.f32 %v600, %v603
    %vm605 = vweird.f32 %v585
    %vm606 = vweird.f32 %v600
    %vm607 = vmor %vm605, %vm606
    %v608 = vsel %vm607, %v600, %v604
    %v609 = vand.u32 2147483647, %v585
    %vm610 = vcmp.eq.f32.partialorder %v609, 8.507059e+37
    %v611 = vand.u32 %v585, 2147483648
    %v612 = vor.u32 1.1754944e-38, %v611
    %v613 = vsel %vm610, %v612, %v608
    %614 = vrot.lane.b32.xlu0 %v215, 48
    %v615 = vpop.permute.xlu0 %614
    %616 = vrot.lane.b32.xlu0 %v218, 48
    %v617 = vpop.permute.xlu0 %616
    %v621 = vsel %vm265, %v577, 0
    %v624 = vsel %vm265, %v579, 0
    %626 = vmatpush.msra.mxu0 0.0
    %627 = vmatpush.msra.mxu0 0.0
    %628 = vmatpush.msra.mxu0 0.0
    %629 = vmatpush.msra.mxu0 0.0
    %630 = vmatpush.msra.mxu0 0.0
    %631 = vmatpush.msra.mxu0 0.0
    %632 = vmatpush.msra.mxu0 0.0
    %633 = vmatpush.msra.mxu0 0.0
    %634 = vmatpush.msra.mxu0 0.0
    %635 = vmatpush.msra.mxu0 0.0
    %636 = vmatpush.msra.mxu0 0.0
    %637 = vmatpush.msra.mxu0 0.0
    %638 = vmatpush.msra.mxu0 0.0
    %639 = vmatpush.msra.mxu0 0.0
    %640 = vmatpush.msra.mxu0 %v617
    %641 = vmatpush.msra.mxu0 %v615
    %642 = vmatmul.f32.gmra.mxu0 %v621
    %v643 = vpop.f32.mrf.mxu0
    %v644 = vadd.f32 0.0, %v643
    %645 = vmatmul.f32.gmra.mxu0 %v624
    %v646 = vpop.f32.mrf.mxu0
    %v647 = vadd.f32 0.0, %v646
    %648 = vdwg.mxu0
    %v649 = vmul.f32 %v644, %v599
    %v650 = vmul.f32 %v647, %v613
    %v652 = vsel %vm233, %v649, 0
    %v655 = vsel %vm233, %v650, 0
    %657 = vmatpush.msra.mxu0 0.0
    %658 = vmatpush.msra.mxu0 0.0
    %659 = vmatpush.msra.mxu0 0.0
    %660 = vmatpush.msra.mxu0 0.0
    %661 = vmatpush.msra.mxu0 0.0
    %662 = vmatpush.msra.mxu0 0.0
    %663 = vmatpush.msra.mxu0 0.0
    %664 = vmatpush.msra.mxu0 0.0
    %665 = vmatpush.msra.mxu0 0.0
    %666 = vmatpush.msra.mxu0 0.0
    %667 = vmatpush.msra.mxu0 0.0
    %668 = vmatpush.msra.mxu0 0.0
    %669 = vmatpush.msra.mxu0 0.0
    %670 = vmatpush.msra.mxu0 0.0
    %671 = vmatpush.msra.mxu0 0.0
    %672 = vmatpush.msra.mxu0 %v224
    %673 = vmatmul.f32.gmra.mxu0 %v652
    %v674 = vpop.f32.mrf.mxu0
    %v675 = vadd.f32 0.0, %v674
    %676 = vmatmul.f32.gmra.mxu0 %v655
    %v677 = vpop.f32.mrf.mxu0
    %v678 = vadd.f32 0.0, %v677
    %679 = vdwg.mxu0
    %v680 = vadd.f32 %v524, %v675
    %v681 = vadd.f32 %v527, %v678
    %682 = vrot.lane.b32.xlu0 %v215, 104
    %v683 = vpop.permute.xlu0 %682
    %684 = vrot.lane.b32.xlu0 %v218, 104
    %v685 = vpop.permute.xlu0 %684
    %686 = vrot.lane.b32.xlu0 %v215, 72
    %v687 = vpop.permute.xlu0 %686
    %688 = vrot.lane.b32.xlu0 %v218, 72
    %v689 = vpop.permute.xlu0 %688
    %v690 = vsel %vm233, %v683, 0
    %v692 = vsel %vm233, %v685, 0
    %v694 = vsel %vm233, %v687, 0
    %v696 = vsel %vm233, %v689, 0
    %698 = vmatpush.xpose.msra.mxu0 0.0
    %699 = vmatpush.xpose.msra.mxu0 0.0
    %700 = vmatpush.xpose.msra.mxu0 0.0
    %701 = vmatpush.xpose.msra.mxu0 0.0
    %702 = vmatpush.xpose.msra.mxu0 0.0
    %703 = vmatpush.xpose.msra.mxu0 0.0
    %704 = vmatpush.xpose.msra.mxu0 0.0
    %705 = vmatpush.xpose.msra.mxu0 0.0
    %706 = vmatpush.xpose.msra.mxu0 0.0
    %707 = vmatpush.xpose.msra.mxu0 0.0
    %708 = vmatpush.xpose.msra.mxu0 0.0
    %709 = vmatpush.xpose.msra.mxu0 0.0
    %710 = vmatpush.xpose.msra.mxu0 0.0
    %711 = vmatpush.xpose.msra.mxu0 0.0
    %712 = vmatpush.xpose.msra.mxu0 %v696
    %713 = vmatpush.xpose.msra.mxu0 %v694
    %714 = vmatmul.f32.gmra.mxu0 %v690
    %v715 = vpop.f32.mrf.mxu0
    %v716 = vadd.f32 %v220, %v715
    %717 = vmatmul.f32.gmra.mxu0 %v692
    %v718 = vpop.f32.mrf.mxu0
    %v719 = vadd.f32 %v221, %v718
    %720 = vdwg.mxu0
    %v721 = vsel %vm265, %v716, -inf
    %722 = vmax.xlane.f32.xlu0 %v721
    %v723 = vpop.xlane.xlu0 %722
    %v724 = vsel %vm265, %v719, -inf
    %725 = vmax.xlane.f32.xlu0 %v724
    %v726 = vpop.xlane.xlu0 %725
    %v727 = vsub.f32 %v716, %v723
    %v728 = vsub.f32 %v719, %v726
    %v729 = vmul.f32 %v727, 1.442695
    %v730 = vpow.pop %v729
    %v731 = vmul.f32 %v728, 1.442695
    %v732 = vpow.pop %v731
    %v733 = vsel %vm265, %v730, 0.0
    %734 = vadd.xlane.f32.xlu0 %v733
    %v735 = vpop.xlane.xlu0 %734
    %v736 = vsel %vm265, %v732, 0.0
    %737 = vadd.xlane.f32.xlu0 %v736
    %v738 = vpop.xlane.xlu0 %737
    %v739 = vrcp.pop %v735
    %v740 = vmul.f32 %v735, %v739
    %v741 = vsub.f32 1.0, %v740
    %v742 = vmul.f32 %v739, %v741
    %v743 = vadd.f32 %v739, %v742
    %vm744 = vweird.f32 %v735
    %vm745 = vweird.f32 %v739
    %vm746 = vmor %vm744, %vm745
    %v747 = vsel %vm746, %v739, %v743
    %v748 = vand.u32 2147483647, %v735
    %vm749 = vcmp.eq.f32.partialorder %v748, 8.507059e+37
    %v750 = vand.u32 %v735, 2147483648
    %v751 = vor.u32 1.1754944e-38, %v750
    %v752 = vsel %vm749, %v751, %v747
    %v753 = vrcp.pop %v738
    %v754 = vmul.f32 %v738, %v753
    %v755 = vsub.f32 1.0, %v754
    %v756 = vmul.f32 %v753, %v755
    %v757 = vadd.f32 %v753, %v756
    %vm758 = vweird.f32 %v738
    %vm759 = vweird.f32 %v753
    %vm760 = vmor %vm758, %vm759
    %v761 = vsel %vm760, %v753, %v757
    %v762 = vand.u32 2147483647, %v738
    %vm763 = vcmp.eq.f32.partialorder %v762, 8.507059e+37
    %v764 = vand.u32 %v738, 2147483648
    %v765 = vor.u32 1.1754944e-38, %v764
    %v766 = vsel %vm763, %v765, %v761
    %767 = vrot.lane.b32.xlu0 %v215, 40
    %v768 = vpop.permute.xlu0 %767
    %769 = vrot.lane.b32.xlu0 %v218, 40
    %v770 = vpop.permute.xlu0 %769
    %v774 = vsel %vm265, %v730, 0
    %v777 = vsel %vm265, %v732, 0
    %779 = vmatpush.msra.mxu0 0.0
    %780 = vmatpush.msra.mxu0 0.0
    %781 = vmatpush.msra.mxu0 0.0
    %782 = vmatpush.msra.mxu0 0.0
    %783 = vmatpush.msra.mxu0 0.0
    %784 = vmatpush.msra.mxu0 0.0
    %785 = vmatpush.msra.mxu0 0.0
    %786 = vmatpush.msra.mxu0 0.0
    %787 = vmatpush.msra.mxu0 0.0
    %788 = vmatpush.msra.mxu0 0.0
    %789 = vmatpush.msra.mxu0 0.0
    %790 = vmatpush.msra.mxu0 0.0
    %791 = vmatpush.msra.mxu0 0.0
    %792 = vmatpush.msra.mxu0 0.0
    %793 = vmatpush.msra.mxu0 %v770
    %794 = vmatpush.msra.mxu0 %v768
    %795 = vmatmul.f32.gmra.mxu0 %v774
    %v796 = vpop.f32.mrf.mxu0
    %v797 = vadd.f32 0.0, %v796
    %798 = vmatmul.f32.gmra.mxu0 %v777
    %v799 = vpop.f32.mrf.mxu0
    %v800 = vadd.f32 0.0, %v799
    %801 = vdwg.mxu0
    %v802 = vmul.f32 %v797, %v752
    %v803 = vmul.f32 %v800, %v766
    %v805 = vsel %vm233, %v802, 0
    %v808 = vsel %vm233, %v803, 0
    %810 = vmatpush.msra.mxu0 0.0
    %811 = vmatpush.msra.mxu0 0.0
    %812 = vmatpush.msra.mxu0 0.0
    %813 = vmatpush.msra.mxu0 0.0
    %814 = vmatpush.msra.mxu0 0.0
    %815 = vmatpush.msra.mxu0 0.0
    %816 = vmatpush.msra.mxu0 0.0
    %817 = vmatpush.msra.mxu0 0.0
    %818 = vmatpush.msra.mxu0 0.0
    %819 = vmatpush.msra.mxu0 0.0
    %820 = vmatpush.msra.mxu0 0.0
    %821 = vmatpush.msra.mxu0 0.0
    %822 = vmatpush.msra.mxu0 0.0
    %823 = vmatpush.msra.mxu0 0.0
    %824 = vmatpush.msra.mxu0 0.0
    %825 = vmatpush.msra.mxu0 %v225
    %826 = vmatmul.f32.gmra.mxu0 %v805
    %v827 = vpop.f32.mrf.mxu0
    %v828 = vadd.f32 0.0, %v827
    %829 = vmatmul.f32.gmra.mxu0 %v808
    %v830 = vpop.f32.mrf.mxu0
    %v831 = vadd.f32 0.0, %v830
    %832 = vdwg.mxu0
    %v833 = vadd.f32 %v680, %v828
    %v834 = vadd.f32 %v681, %v831
    %v835 = vperm.slane %v226, 0
    %v836 = vadd.f32 %v833, %v835
    %v837 = vadd.f32 %v834, %v835
    %v838 = vadd.f32 %v89, %v836
    %v839 = vadd.f32 %v90, %v837
    %v840 = vsel %vm93, %v838, 0.0
    %841 = vadd.xlane.f32.xlu0 %v840
    %v842 = vpop.xlane.xlu0 %841
    %v843 = vsel %vm93, %v839, 0.0
    %844 = vadd.xlane.f32.xlu0 %v843
    %v845 = vpop.xlane.xlu0 %844
    %v846 = vmul.f32 %v842, %v106
    %v847 = vmul.f32 %v845, %v106
    %v848 = vsub.f32 %v838, %v846
    %v849 = vsub.f32 %v839, %v847
    %v850 = vmul.f32 %v848, %v848
    %v851 = vmul.f32 %v849, %v849
    %v852 = vsel %vm93, %v850, 0.0
    %853 = vadd.xlane.f32.xlu0 %v852
    %v854 = vpop.xlane.xlu0 %853
    %v855 = vsel %vm93, %v851, 0.0
    %856 = vadd.xlane.f32.xlu0 %v855
    %v857 = vpop.xlane.xlu0 %856
    %v858 = vmul.f32 %v854, 0.032258064
    %v859 = vmul.f32 %v857, 0.032258064
    %v860 = vrsqrt.pop %v858
    %v861 = vmul.f32 %v860, %v858
    %v862 = vmul.f32 %v861, %v860
    %v863 = vmul.f32 0.5, %v862
    %v864 = vsub.f32 1.5, %v863
    %v865 = vmul.f32 %v860, %v864
    %v866 = vmul.f32 %v858, %v865
    %vm867 = vcmp.eq.f32.partialorder %v858, inf
    %v868 = vsel %vm867, %v858, %v866
    %vm869 = vcmp.eq.f32.partialorder %v858, 0.0
    %v870 = vand.u32 %v858, 2147483648
    %v871 = vsel %vm869, %v870, %v868
    %v872 = vrsqrt.pop %v859
    %v873 = vmul.f32 %v872, %v859
    %v874 = vmul.f32 %v873, %v872
    %v875 = vmul.f32 0.5, %v874
    %v876 = vsub.f32 1.5, %v875
    %v877 = vmul.f32 %v872, %v876
    %v878 = vmul.f32 %v859, %v877
    %vm879 = vcmp.eq.f32.partialorder %v859, inf
    %v880 = vsel %vm879, %v859, %v878
    %vm881 = vcmp.eq.f32.partialorder %v859, 0.0
    %v882 = vand.u32 %v859, 2147483648
    %v883 = vsel %vm881, %v882, %v880
    %v884 = vld [vmem:[#allocation7 + $0x2] sm:$0x1]
    %v885 = vperm.slane %v884, 0
    %v886 = vmul.f32 %v885, %v848
    %v887 = vmul.f32 %v885, %v849
    %v888 = vadd.f32 %v871, 1e-06
    %v889 = vadd.f32 %v883, 1e-06
    %v890 = vrcp.pop %v888
    %v891 = vmul.f32 %v888, %v890
    %v892 = vsub.f32 1.0, %v891
    %v893 = vmul.f32 %v890, %v892
    %v894 = vadd.f32 %v890, %v893
    %vm895 = vweird.f32 %v888
    %vm896 = vweird.f32 %v890
    %vm897 = vmor %vm895, %vm896
    %v898 = vsel %vm897, %v890, %v894
    %v899 = vand.u32 2147483647, %v888
    %vm900 = vcmp.eq.f32.partialorder %v899, 8.507059e+37
    %v901 = vand.u32 %v888, 2147483648
    %v902 = vor.u32 1.1754944e-38, %v901
    %v903 = vsel %vm900, %v902, %v898
    %v904 = vrcp.pop %v889
    %v905 = vmul.f32 %v889, %v904
    %v906 = vsub.f32 1.0, %v905
    %v907 = vmul.f32 %v904, %v906
    %v908 = vadd.f32 %v904, %v907
    %vm909 = vweird.f32 %v889
    %vm910 = vweird.f32 %v904
    %vm911 = vmor %vm909, %vm910
    %v912 = vsel %vm911, %v904, %v908
    %v913 = vand.u32 2147483647, %v889
    %vm914 = vcmp.eq.f32.partialorder %v913, 8.507059e+37
    %v915 = vand.u32 %v889, 2147483648
    %v916 = vor.u32 1.1754944e-38, %v915
    %v917 = vsel %vm914, %v916, %v912
    %v918 = vmul.f32 %v886, %v903
    %v919 = vmul.f32 %v887, %v917
    %v920 = vld [vmem:[#allocation7 + $0x3] sm:$0x1]
    %v921 = vperm.slane %v920, 0
    %v922 = vadd.f32 %v918, %v921
    %v923 = vadd.f32 %v919, %v921
    %v924 = vld [vmem:[%s7] sm:$0xff]
    %v925 = vld [vmem:[%s7 + $0x8] sm:$0xff]
    %v926 = vld [vmem:[%s7 + $0x10] sm:$0xff]
    %v927 = vld [vmem:[%s7 + $0x18] sm:$0xff]
    %v928 = vld [vmem:[#allocation7 + $0x8] sm:$0x1]
    %v929 = vperm.slane %v928, 0
    %v931 = vsel %vm93, %v922, 0
    %v934 = vsel %vm93, %v923, 0
    %936 = vmatpush.msra.mxu0 0.0
    %937 = vmatpush.msra.mxu0 0.0
    %938 = vmatpush.msra.mxu0 0.0
    %939 = vmatpush.msra.mxu0 0.0
    %940 = vmatpush.msra.mxu0 0.0
    %941 = vmatpush.msra.mxu0 0.0
    %942 = vmatpush.msra.mxu0 0.0
    %943 = vmatpush.msra.mxu0 0.0
    %944 = vmatpush.msra.mxu0 0.0
    %945 = vmatpush.msra.mxu0 0.0
    %946 = vmatpush.msra.mxu0 0.0
    %947 = vmatpush.msra.mxu0 0.0
    %948 = vmatpush.msra.mxu0 %v927
    %949 = vmatpush.msra.mxu0 %v926
    %950 = vmatpush.msra.mxu0 %v925
    %951 = vmatpush.msra.mxu0 %v924
    %952 = vmatmul.f32.gmra.mxu0 %v931
    %v953 = vpop.f32.mrf.mxu0
    %v954 = vadd.f32 %v929, %v953
    %955 = vmatmul.f32.gmra.mxu0 %v934
    %v956 = vpop.f32.mrf.mxu0
    %v957 = vadd.f32 %v929, %v956
    %958 = vdwg.mxu0
    %v959 = vld [vmem:[%s8] sm:$0xff]
    %v960 = vld [vmem:[%s8 + $0x8] sm:$0xff]
    %v961 = vld [vmem:[%s8 + $0x10] sm:$0xff]
    %v962 = vld [vmem:[%s8 + $0x18] sm:$0xff]
    %v963 = vld [vmem:[#allocation7 + $0x9] sm:$0x1]
    %v964 = vperm.slane %v963, 0
    %v966 = vsel %vm93, %v91, 0
    %v969 = vsel %vm93, %v92, 0
    %971 = vmatpush.msra.mxu0 0.0
    %972 = vmatpush.msra.mxu0 0.0
    %973 = vmatpush.msra.mxu0 0.0
    %974 = vmatpush.msra.mxu0 0.0
    %975 = vmatpush.msra.mxu0 0.0
    %976 = vmatpush.msra.mxu0 0.0
    %977 = vmatpush.msra.mxu0 0.0
    %978 = vmatpush.msra.mxu0 0.0
    %979 = vmatpush.msra.mxu0 0.0
    %980 = vmatpush.msra.mxu0 0.0
    %981 = vmatpush.msra.mxu0 0.0
    %982 = vmatpush.msra.mxu0 0.0
    %983 = vmatpush.msra.mxu0 %v962
    %984 = vmatpush.msra.mxu0 %v961
    %985 = vmatpush.msra.mxu0 %v960
    %986 = vmatpush.msra.mxu0 %v959
    %987 = vmatmul.f32.gmra.mxu0 %v966
    %v988 = vpop.f32.mrf.mxu0
    %v989 = vadd.f32 %v964, %v988
    %990 = vmatmul.f32.gmra.mxu0 %v969
    %v991 = vpop.f32.mrf.mxu0
    %v992 = vadd.f32 %v964, %v991
    %993 = vdwg.mxu0
    %v994 = vld [vmem:[%s3] sm:$0xff]
    %v995 = vld [vmem:[%s3 + $0x8] sm:$0xff]
    %v996 = vld [vmem:[%s9] sm:$0xff]
    %v997 = vld [vmem:[%s9 + $0x8] sm:$0xff]
    %v998 = vld [vmem:[%s9 + $0x10] sm:$0xff]
    %v999 = vld [vmem:[%s9 + $0x18] sm:$0xff]
    %v1000 = vld [vmem:[#allocation7 + $0xa] sm:$0x1]
    %v1002 = vsel %vm233, %v954, 0
    %v1005 = vsel %vm233, %v957, 0
    %v1008 = vsel %vm233, %v989, 0
    %v1011 = vsel %vm233, %v992, 0
    %1013 = vmatpush.xpose.msra.mxu0 0.0
    %1014 = vmatpush.xpose.msra.mxu0 0.0
    %1015 = vmatpush.xpose.msra.mxu0 0.0
    %1016 = vmatpush.xpose.msra.mxu0 0.0
    %1017 = vmatpush.xpose.msra.mxu0 0.0
    %1018 = vmatpush.xpose.msra.mxu0 0.0
    %1019 = vmatpush.xpose.msra.mxu0 0.0
    %1020 = vmatpush.xpose.msra.mxu0 0.0
    %1021 = vmatpush.xpose.msra.mxu0 0.0
    %1022 = vmatpush.xpose.msra.mxu0 0.0
    %1023 = vmatpush.xpose.msra.mxu0 0.0
    %1024 = vmatpush.xpose.msra.mxu0 0.0
    %1025 = vmatpush.xpose.msra.mxu0 0.0
    %1026 = vmatpush.xpose.msra.mxu0 0.0
    %1027 = vmatpush.xpose.msra.mxu0 %v1011
    %1028 = vmatpush.xpose.msra.mxu0 %v1008
    %1029 = vmatmul.f32.gmra.mxu0 %v1002
    %v1030 = vpop.f32.mrf.mxu0
    %v1031 = vadd.f32 %v994, %v1030
    %1032 = vmatmul.f32.gmra.mxu0 %v1005
    %v1033 = vpop.f32.mrf.mxu0
    %v1034 = vadd.f32 %v995, %v1033
    %1035 = vdwg.mxu0
    %v1036 = vsel %vm265, %v1031, -inf
    %1037 = vmax.xlane.f32.xlu0 %v1036
    %v1038 = vpop.xlane.xlu0 %1037
    %v1039 = vsel %vm265, %v1034, -inf
    %1040 = vmax.xlane.f32.xlu0 %v1039
    %v1041 = vpop.xlane.xlu0 %1040
    %v1042 = vsub.f32 %v1031, %v1038
    %v1043 = vsub.f32 %v1034, %v1041
    %v1044 = vmul.f32 %v1042, 1.442695
    %v1045 = vpow.pop %v1044
    %v1046 = vmul.f32 %v1043, 1.442695
    %v1047 = vpow.pop %v1046
    %v1048 = vsel %vm265, %v1045, 0.0
    %1049 = vadd.xlane.f32.xlu0 %v1048
    %v1050 = vpop.xlane.xlu0 %1049
    %v1051 = vsel %vm265, %v1047, 0.0
    %1052 = vadd.xlane.f32.xlu0 %v1051
    %v1053 = vpop.xlane.xlu0 %1052
    %v1054 = vrcp.pop %v1050
    %v1055 = vmul.f32 %v1050, %v1054
    %v1056 = vsub.f32 1.0, %v1055
    %v1057 = vmul.f32 %v1054, %v1056
    %v1058 = vadd.f32 %v1054, %v1057
    %vm1059 = vweird.f32 %v1050
    %vm1060 = vweird.f32 %v1054
    %vm1061 = vmor %vm1059, %vm1060
    %v1062 = vsel %vm1061, %v1054, %v1058
    %v1063 = vand.u32 2147483647, %v1050
    %vm1064 = vcmp.eq.f32.partialorder %v1063, 8.507059e+37
    %v1065 = vand.u32 %v1050, 2147483648
    %v1066 = vor.u32 1.1754944e-38, %v1065
    %v1067 = vsel %vm1064, %v1066, %v1062
    %v1068 = vrcp.pop %v1053
    %v1069 = vmul.f32 %v1053, %v1068
    %v1070 = vsub.f32 1.0, %v1069
    %v1071 = vmul.f32 %v1068, %v1070
    %v1072 = vadd.f32 %v1068, %v1071
    %vm1073 = vweird.f32 %v1053
    %vm1074 = vweird.f32 %v1068
    %vm1075 = vmor %vm1073, %vm1074
    %v1076 = vsel %vm1075, %v1068, %v1072
    %v1077 = vand.u32 2147483647, %v1053
    %vm1078 = vcmp.eq.f32.partialorder %v1077, 8.507059e+37
    %v1079 = vand.u32 %v1053, 2147483648
    %v1080 = vor.u32 1.1754944e-38, %v1079
    %v1081 = vsel %vm1078, %v1080, %v1076
    %1082 = vrot.lane.b32.xlu0 %v989, 96
    %v1083 = vpop.permute.xlu0 %1082
    %1084 = vrot.lane.b32.xlu0 %v992, 96
    %v1085 = vpop.permute.xlu0 %1084
    %v1089 = vsel %vm265, %v1045, 0
    %v1092 = vsel %vm265, %v1047, 0
    %1094 = vmatpush.msra.mxu0 0.0
    %1095 = vmatpush.msra.mxu0 0.0
    %1096 = vmatpush.msra.mxu0 0.0
    %1097 = vmatpush.msra.mxu0 0.0
    %1098 = vmatpush.msra.mxu0 0.0
    %1099 = vmatpush.msra.mxu0 0.0
    %1100 = vmatpush.msra.mxu0 0.0
    %1101 = vmatpush.msra.mxu0 0.0
    %1102 = vmatpush.msra.mxu0 0.0
    %1103 = vmatpush.msra.mxu0 0.0
    %1104 = vmatpush.msra.mxu0 0.0
    %1105 = vmatpush.msra.mxu0 0.0
    %1106 = vmatpush.msra.mxu0 0.0
    %1107 = vmatpush.msra.mxu0 0.0
    %1108 = vmatpush.msra.mxu0 %v1085
    %1109 = vmatpush.msra.mxu0 %v1083
    %1110 = vmatmul.f32.gmra.mxu0 %v1089
    %v1111 = vpop.f32.mrf.mxu0
    %v1112 = vadd.f32 0.0, %v1111
    %1113 = vmatmul.f32.gmra.mxu0 %v1092
    %v1114 = vpop.f32.mrf.mxu0
    %v1115 = vadd.f32 0.0, %v1114
    %1116 = vdwg.mxu0
    %v1117 = vmul.f32 %v1112, %v1067
    %v1118 = vmul.f32 %v1115, %v1081
    %1119 = vrot.lane.b32.xlu0 %v954, 120
    %v1120 = vpop.permute.xlu0 %1119
    %1121 = vrot.lane.b32.xlu0 %v957, 120
    %v1122 = vpop.permute.xlu0 %1121
    %1123 = vrot.lane.b32.xlu0 %v989, 120
    %v1124 = vpop.permute.xlu0 %1123
    %1125 = vrot.lane.b32.xlu0 %v992, 120
    %v1126 = vpop.permute.xlu0 %1125
    %v1127 = vsel %vm233, %v1120, 0
    %v1129 = vsel %vm233, %v1122, 0
    %v1131 = vsel %vm233, %v1124, 0
    %v1133 = vsel %vm233, %v1126, 0
    %1135 = vmatpush.xpose.msra.mxu0 0.0
    %1136 = vmatpush.xpose.msra.mxu0 0.0
    %1137 = vmatpush.xpose.msra.mxu0 0.0
    %1138 = vmatpush.xpose.msra.mxu0 0.0
    %1139 = vmatpush.xpose.msra.mxu0 0.0
    %1140 = vmatpush.xpose.msra.mxu0 0.0
    %1141 = vmatpush.xpose.msra.mxu0 0.0
    %1142 = vmatpush.xpose.msra.mxu0 0.0
    %1143 = vmatpush.xpose.msra.mxu0 0.0
    %1144 = vmatpush.xpose.msra.mxu0 0.0
    %1145 = vmatpush.xpose.msra.mxu0 0.0
    %1146 = vmatpush.xpose.msra.mxu0 0.0
    %1147 = vmatpush.xpose.msra.mxu0 0.0
    %1148 = vmatpush.xpose.msra.mxu0 0.0
    %1149 = vmatpush.xpose.msra.mxu0 %v1133
    %1150 = vmatpush.xpose.msra.mxu0 %v1131
    %1151 = vmatmul.f32.gmra.mxu0 %v1127
    %v1152 = vpop.f32.mrf.mxu0
    %v1153 = vadd.f32 %v994, %v1152
    %1154 = vmatmul.f32.gmra.mxu0 %v1129
    %v1155 = vpop.f32.mrf.mxu0
    %v1156 = vadd.f32 %v995, %v1155
    %1157 = vdwg.mxu0
    %v1158 = vsel %vm265, %v1153, -inf
    %1159 = vmax.xlane.f32.xlu0 %v1158
    %v1160 = vpop.xlane.xlu0 %1159
    %v1161 = vsel %vm265, %v1156, -inf
    %1162 = vmax.xlane.f32.xlu0 %v1161
    %v1163 = vpop.xlane.xlu0 %1162
    %v1164 = vsub.f32 %v1153, %v1160
    %v1165 = vsub.f32 %v1156, %v1163
    %v1166 = vmul.f32 %v1164, 1.442695
    %v1167 = vpow.pop %v1166
    %v1168 = vmul.f32 %v1165, 1.442695
    %v1169 = vpow.pop %v1168
    %v1170 = vsel %vm265, %v1167, 0.0
    %1171 = vadd.xlane.f32.xlu0 %v1170
    %v1172 = vpop.xlane.xlu0 %1171
    %v1173 = vsel %vm265, %v1169, 0.0
    %1174 = vadd.xlane.f32.xlu0 %v1173
    %v1175 = vpop.xlane.xlu0 %1174
    %v1176 = vrcp.pop %v1172
    %v1177 = vmul.f32 %v1172, %v1176
    %v1178 = vsub.f32 1.0, %v1177
    %v1179 = vmul.f32 %v1176, %v1178
    %v1180 = vadd.f32 %v1176, %v1179
    %vm1181 = vweird.f32 %v1172
    %vm1182 = vweird.f32 %v1176
    %vm1183 = vmor %vm1181, %vm1182
    %v1184 = vsel %vm1183, %v1176, %v1180
    %v1185 = vand.u32 2147483647, %v1172
    %vm1186 = vcmp.eq.f32.partialorder %v1185, 8.507059e+37
    %v1187 = vand.u32 %v1172, 2147483648
    %v1188 = vor.u32 1.1754944e-38, %v1187
    %v1189 = vsel %vm1186, %v1188, %v1184
    %v1190 = vrcp.pop %v1175
    %v1191 = vmul.f32 %v1175, %v1190
    %v1192 = vsub.f32 1.0, %v1191
    %v1193 = vmul.f32 %v1190, %v1192
    %v1194 = vadd.f32 %v1190, %v1193
    %vm1195 = vweird.f32 %v1175
    %vm1196 = vweird.f32 %v1190
    %vm1197 = vmor %vm1195, %vm1196
    %v1198 = vsel %vm1197, %v1190, %v1194
    %v1199 = vand.u32 2147483647, %v1175
    %vm1200 = vcmp.eq.f32.partialorder %v1199, 8.507059e+37
    %v1201 = vand.u32 %v1175, 2147483648
    %v1202 = vor.u32 1.1754944e-38, %v1201
    %v1203 = vsel %vm1200, %v1202, %v1198
    %1204 = vrot.lane.b32.xlu0 %v989, 88
    %v1205 = vpop.permute.xlu0 %1204
    %1206 = vrot.lane.b32.xlu0 %v992, 88
    %v1207 = vpop.permute.xlu0 %1206
    %v1211 = vsel %vm265, %v1167, 0
    %v1214 = vsel %vm265, %v1169, 0
    %1216 = vmatpush.msra.mxu0 0.0
    %1217 = vmatpush.msra.mxu0 0.0
    %1218 = vmatpush.msra.mxu0 0.0
    %1219 = vmatpush.msra.mxu0 0.0
    %1220 = vmatpush.msra.mxu0 0.0
    %1221 = vmatpush.msra.mxu0 0.0
    %1222 = vmatpush.msra.mxu0 0.0
    %1223 = vmatpush.msra.mxu0 0.0
    %1224 = vmatpush.msra.mxu0 0.0
    %1225 = vmatpush.msra.mxu0 0.0
    %1226 = vmatpush.msra.mxu0 0.0
    %1227 = vmatpush.msra.mxu0 0.0
    %1228 = vmatpush.msra.mxu0 0.0
    %1229 = vmatpush.msra.mxu0 0.0
    %1230 = vmatpush.msra.mxu0 %v1207
    %1231 = vmatpush.msra.mxu0 %v1205
    %1232 = vmatmul.f32.gmra.mxu0 %v1211
    %v1233 = vpop.f32.mrf.mxu0
    %v1234 = vadd.f32 0.0, %v1233
    %1235 = vmatmul.f32.gmra.mxu0 %v1214
    %v1236 = vpop.f32.mrf.mxu0
    %v1237 = vadd.f32 0.0, %v1236
    %1238 = vdwg.mxu0
    %v1239 = vmul.f32 %v1234, %v1189
    %v1240 = vmul.f32 %v1237, %v1203
    %v1242 = vsel %vm233, %v1239, 0
    %v1245 = vsel %vm233, %v1240, 0
    %1247 = vmatpush.msra.mxu0 0.0
    %1248 = vmatpush.msra.mxu0 0.0
    %1249 = vmatpush.msra.mxu0 0.0
    %1250 = vmatpush.msra.mxu0 0.0
    %1251 = vmatpush.msra.mxu0 0.0
    %1252 = vmatpush.msra.mxu0 0.0
    %1253 = vmatpush.msra.mxu0 0.0
    %1254 = vmatpush.msra.mxu0 0.0
    %1255 = vmatpush.msra.mxu0 0.0
    %1256 = vmatpush.msra.mxu0 0.0
    %1257 = vmatpush.msra.mxu0 0.0
    %1258 = vmatpush.msra.mxu0 0.0
    %1259 = vmatpush.msra.mxu0 0.0
    %1260 = vmatpush.msra.mxu0 0.0
    %1261 = vmatpush.msra.mxu0 0.0
    %1262 = vmatpush.msra.mxu0 %v997
    %1263 = vmatmul.f32.gmra.mxu0 %v1242
    %v1264 = vpop.f32.mrf.mxu0
    %v1265 = vadd.f32 0.0, %v1264
    %1266 = vmatmul.f32.gmra.mxu0 %v1245
    %v1267 = vpop.f32.mrf.mxu0
    %v1268 = vadd.f32 0.0, %v1267
    %1269 = vdwg.mxu0
    %v1271 = vsel %vm233, %v1117, 0
    %v1274 = vsel %vm233, %v1118, 0
    %1276 = vmatpush.msra.mxu0 0.0
    %1277 = vmatpush.msra.mxu0 0.0
    %1278 = vmatpush.msra.mxu0 0.0
    %1279 = vmatpush.msra.mxu0 0.0
    %1280 = vmatpush.msra.mxu0 0.0
    %1281 = vmatpush.msra.mxu0 0.0
    %1282 = vmatpush.msra.mxu0 0.0
    %1283 = vmatpush.msra.mxu0 0.0
    %1284 = vmatpush.msra.mxu0 0.0
    %1285 = vmatpush.msra.mxu0 0.0
    %1286 = vmatpush.msra.mxu0 0.0
    %1287 = vmatpush.msra.mxu0 0.0
    %1288 = vmatpush.msra.mxu0 0.0
    %1289 = vmatpush.msra.mxu0 0.0
    %1290 = vmatpush.msra.mxu0 0.0
    %1291 = vmatpush.msra.mxu0 %v996
    %1292 = vmatmul.f32.gmra.mxu0 %v1271
    %v1293 = vpop.f32.mrf.mxu0
    %v1294 = vadd.f32 %v1265, %v1293
    %1295 = vmatmul.f32.gmra.mxu0 %v1274
    %v1296 = vpop.f32.mrf.mxu0
    %v1297 = vadd.f32 %v1268, %v1296
    %1298 = vdwg.mxu0
    %1299 = vrot.lane.b32.xlu0 %v954, 112
    %v1300 = vpop.permute.xlu0 %1299
    %1301 = vrot.lane.b32.xlu0 %v957, 112
    %v1302 = vpop.permute.xlu0 %1301
    %1303 = vrot.lane.b32.xlu0 %v989, 112
    %v1304 = vpop.permute.xlu0 %1303
    %1305 = vrot.lane.b32.xlu0 %v992, 112
    %v1306 = vpop.permute.xlu0 %1305
    %v1307 = vsel %vm233, %v1300, 0
    %v1309 = vsel %vm233, %v1302, 0
    %v1311 = vsel %vm233, %v1304, 0
    %v1313 = vsel %vm233, %v1306, 0
    %1315 = vmatpush.xpose.msra.mxu0 0.0
    %1316 = vmatpush.xpose.msra.mxu0 0.0
    %1317 = vmatpush.xpose.msra.mxu0 0.0
    %1318 = vmatpush.xpose.msra.mxu0 0.0
    %1319 = vmatpush.xpose.msra.mxu0 0.0
    %1320 = vmatpush.xpose.msra.mxu0 0.0
    %1321 = vmatpush.xpose.msra.mxu0 0.0
    %1322 = vmatpush.xpose.msra.mxu0 0.0
    %1323 = vmatpush.xpose.msra.mxu0 0.0
    %1324 = vmatpush.xpose.msra.mxu0 0.0
    %1325 = vmatpush.xpose.msra.mxu0 0.0
    %1326 = vmatpush.xpose.msra.mxu0 0.0
    %1327 = vmatpush.xpose.msra.mxu0 0.0
    %1328 = vmatpush.xpose.msra.mxu0 0.0
    %1329 = vmatpush.xpose.msra.mxu0 %v1313
    %1330 = vmatpush.xpose.msra.mxu0 %v1311
    %1331 = vmatmul.f32.gmra.mxu0 %v1307
    %v1332 = vpop.f32.mrf.mxu0
    %v1333 = vadd.f32 %v994, %v1332
    %1334 = vmatmul.f32.gmra.mxu0 %v1309
    %v1335 = vpop.f32.mrf.mxu0
    %v1336 = vadd.f32 %v995, %v1335
    %1337 = vdwg.mxu0
    %v1338 = vsel %vm265, %v1333, -inf
    %1339 = vmax.xlane.f32.xlu0 %v1338
    %v1340 = vpop.xlane.xlu0 %1339
    %v1341 = vsel %vm265, %v1336, -inf
    %1342 = vmax.xlane.f32.xlu0 %v1341
    %v1343 = vpop.xlane.xlu0 %1342
    %v1344 = vsub.f32 %v1333, %v1340
    %v1345 = vsub.f32 %v1336, %v1343
    %v1346 = vmul.f32 %v1344, 1.442695
    %v1347 = vpow.pop %v1346
    %v1348 = vmul.f32 %v1345, 1.442695
    %v1349 = vpow.pop %v1348
    %v1350 = vsel %vm265, %v1347, 0.0
    %1351 = vadd.xlane.f32.xlu0 %v1350
    %v1352 = vpop.xlane.xlu0 %1351
    %v1353 = vsel %vm265, %v1349, 0.0
    %1354 = vadd.xlane.f32.xlu0 %v1353
    %v1355 = vpop.xlane.xlu0 %1354
    %v1356 = vrcp.pop %v1352
    %v1357 = vmul.f32 %v1352, %v1356
    %v1358 = vsub.f32 1.0, %v1357
    %v1359 = vmul.f32 %v1356, %v1358
    %v1360 = vadd.f32 %v1356, %v1359
    %vm1361 = vweird.f32 %v1352
    %vm1362 = vweird.f32 %v1356
    %vm1363 = vmor %vm1361, %vm1362
    %v1364 = vsel %vm1363, %v1356, %v1360
    %v1365 = vand.u32 2147483647, %v1352
    %vm1366 = vcmp.eq.f32.partialorder %v1365, 8.507059e+37
    %v1367 = vand.u32 %v1352, 2147483648
    %v1368 = vor.u32 1.1754944e-38, %v1367
    %v1369 = vsel %vm1366, %v1368, %v1364
    %v1370 = vrcp.pop %v1355
    %v1371 = vmul.f32 %v1355, %v1370
    %v1372 = vsub.f32 1.0, %v1371
    %v1373 = vmul.f32 %v1370, %v1372
    %v1374 = vadd.f32 %v1370, %v1373
    %vm1375 = vweird.f32 %v1355
    %vm1376 = vweird.f32 %v1370
    %vm1377 = vmor %vm1375, %vm1376
    %v1378 = vsel %vm1377, %v1370, %v1374
    %v1379 = vand.u32 2147483647, %v1355
    %vm1380 = vcmp.eq.f32.partialorder %v1379, 8.507059e+37
    %v1381 = vand.u32 %v1355, 2147483648
    %v1382 = vor.u32 1.1754944e-38, %v1381
    %v1383 = vsel %vm1380, %v1382, %v1378
    %1384 = vrot.lane.b32.xlu0 %v989, 80
    %v1385 = vpop.permute.xlu0 %1384
    %1386 = vrot.lane.b32.xlu0 %v992, 80
    %v1387 = vpop.permute.xlu0 %1386
    %v1391 = vsel %vm265, %v1347, 0
    %v1394 = vsel %vm265, %v1349, 0
    %1396 = vmatpush.msra.mxu0 0.0
    %1397 = vmatpush.msra.mxu0 0.0
    %1398 = vmatpush.msra.mxu0 0.0
    %1399 = vmatpush.msra.mxu0 0.0
    %1400 = vmatpush.msra.mxu0 0.0
    %1401 = vmatpush.msra.mxu0 0.0
    %1402 = vmatpush.msra.mxu0 0.0
    %1403 = vmatpush.msra.mxu0 0.0
    %1404 = vmatpush.msra.mxu0 0.0
    %1405 = vmatpush.msra.mxu0 0.0
    %1406 = vmatpush.msra.mxu0 0.0
    %1407 = vmatpush.msra.mxu0 0.0
    %1408 = vmatpush.msra.mxu0 0.0
    %1409 = vmatpush.msra.mxu0 0.0
    %1410 = vmatpush.msra.mxu0 %v1387
    %1411 = vmatpush.msra.mxu0 %v1385
    %1412 = vmatmul.f32.gmra.mxu0 %v1391
    %v1413 = vpop.f32.mrf.mxu0
    %v1414 = vadd.f32 0.0, %v1413
    %1415 = vmatmul.f32.gmra.mxu0 %v1394
    %v1416 = vpop.f32.mrf.mxu0
    %v1417 = vadd.f32 0.0, %v1416
    %1418 = vdwg.mxu0
    %v1419 = vmul.f32 %v1414, %v1369
    %v1420 = vmul.f32 %v1417, %v1383
    %v1422 = vsel %vm233, %v1419, 0
    %v1425 = vsel %vm233, %v1420, 0
    %1427 = vmatpush.msra.mxu0 0.0
    %1428 = vmatpush.msra.mxu0 0.0
    %1429 = vmatpush.msra.mxu0 0.0
    %1430 = vmatpush.msra.mxu0 0.0
    %1431 = vmatpush.msra.mxu0 0.0
    %1432 = vmatpush.msra.mxu0 0.0
    %1433 = vmatpush.msra.mxu0 0.0
    %1434 = vmatpush.msra.mxu0 0.0
    %1435 = vmatpush.msra.mxu0 0.0
    %1436 = vmatpush.msra.mxu0 0.0
    %1437 = vmatpush.msra.mxu0 0.0
    %1438 = vmatpush.msra.mxu0 0.0
    %1439 = vmatpush.msra.mxu0 0.0
    %1440 = vmatpush.msra.mxu0 0.0
    %1441 = vmatpush.msra.mxu0 0.0
    %1442 = vmatpush.msra.mxu0 %v998
    %1443 = vmatmul.f32.gmra.mxu0 %v1422
    %v1444 = vpop.f32.mrf.mxu0
    %v1445 = vadd.f32 0.0, %v1444
    %1446 = vmatmul.f32.gmra.mxu0 %v1425
    %v1447 = vpop.f32.mrf.mxu0
    %v1448 = vadd.f32 0.0, %v1447
    %1449 = vdwg.mxu0
    %v1450 = vadd.f32 %v1294, %v1445
    %v1451 = vadd.f32 %v1297, %v1448
    %1452 = vrot.lane.b32.xlu0 %v954, 104
    %v1453 = vpop.permute.xlu0 %1452
    %1454 = vrot.lane.b32.xlu0 %v957, 104
    %v1455 = vpop.permute.xlu0 %1454
    %1456 = vrot.lane.b32.xlu0 %v989, 104
    %v1457 = vpop.permute.xlu0 %1456
    %1458 = vrot.lane.b32.xlu0 %v992, 104
    %v1459 = vpop.permute.xlu0 %1458
    %v1460 = vsel %vm233, %v1453, 0
    %v1462 = vsel %vm233, %v1455, 0
    %v1464 = vsel %vm233, %v1457, 0
    %v1466 = vsel %vm233, %v1459, 0
    %1468 = vmatpush.xpose.msra.mxu0 0.0
    %1469 = vmatpush.xpose.msra.mxu0 0.0
    %1470 = vmatpush.xpose.msra.mxu0 0.0
    %1471 = vmatpush.xpose.msra.mxu0 0.0
    %1472 = vmatpush.xpose.msra.mxu0 0.0
    %1473 = vmatpush.xpose.msra.mxu0 0.0
    %1474 = vmatpush.xpose.msra.mxu0 0.0
    %1475 = vmatpush.xpose.msra.mxu0 0.0
    %1476 = vmatpush.xpose.msra.mxu0 0.0
    %1477 = vmatpush.xpose.msra.mxu0 0.0
    %1478 = vmatpush.xpose.msra.mxu0 0.0
    %1479 = vmatpush.xpose.msra.mxu0 0.0
    %1480 = vmatpush.xpose.msra.mxu0 0.0
    %1481 = vmatpush.xpose.msra.mxu0 0.0
    %1482 = vmatpush.xpose.msra.mxu0 %v1466
    %1483 = vmatpush.xpose.msra.mxu0 %v1464
    %1484 = vmatmul.f32.gmra.mxu0 %v1460
    %v1485 = vpop.f32.mrf.mxu0
    %v1486 = vadd.f32 %v994, %v1485
    %1487 = vmatmul.f32.gmra.mxu0 %v1462
    %v1488 = vpop.f32.mrf.mxu0
    %v1489 = vadd.f32 %v995, %v1488
    %1490 = vdwg.mxu0
    %v1491 = vsel %vm265, %v1486, -inf
    %1492 = vmax.xlane.f32.xlu0 %v1491
    %v1493 = vpop.xlane.xlu0 %1492
    %v1494 = vsel %vm265, %v1489, -inf
    %1495 = vmax.xlane.f32.xlu0 %v1494
    %v1496 = vpop.xlane.xlu0 %1495
    %v1497 = vsub.f32 %v1486, %v1493
    %v1498 = vsub.f32 %v1489, %v1496
    %v1499 = vmul.f32 %v1497, 1.442695
    %v1500 = vpow.pop %v1499
    %v1501 = vmul.f32 %v1498, 1.442695
    %v1502 = vpow.pop %v1501
    %v1503 = vsel %vm265, %v1500, 0.0
    %1504 = vadd.xlane.f32.xlu0 %v1503
    %v1505 = vpop.xlane.xlu0 %1504
    %v1506 = vsel %vm265, %v1502, 0.0
    %1507 = vadd.xlane.f32.xlu0 %v1506
    %v1508 = vpop.xlane.xlu0 %1507
    %v1509 = vrcp.pop %v1505
    %v1510 = vmul.f32 %v1505, %v1509
    %v1511 = vsub.f32 1.0, %v1510
    %v1512 = vmul.f32 %v1509, %v1511
    %v1513 = vadd.f32 %v1509, %v1512
    %vm1514 = vweird.f32 %v1505
    %vm1515 = vweird.f32 %v1509
    %vm1516 = vmor %vm1514, %vm1515
    %v1517 = vsel %vm1516, %v1509, %v1513
    %v1518 = vand.u32 2147483647, %v1505
    %vm1519 = vcmp.eq.f32.partialorder %v1518, 8.507059e+37
    %v1520 = vand.u32 %v1505, 2147483648
    %v1521 = vor.u32 1.1754944e-38, %v1520
    %v1522 = vsel %vm1519, %v1521, %v1517
    %v1523 = vrcp.pop %v1508
    %v1524 = vmul.f32 %v1508, %v1523
    %v1525 = vsub.f32 1.0, %v1524
    %v1526 = vmul.f32 %v1523, %v1525
    %v1527 = vadd.f32 %v1523, %v1526
    %vm1528 = vweird.f32 %v1508
    %vm1529 = vweird.f32 %v1523
    %vm1530 = vmor %vm1528, %vm1529
    %v1531 = vsel %vm1530, %v1523, %v1527
    %v1532 = vand.u32 2147483647, %v1508
    %vm1533 = vcmp.eq.f32.partialorder %v1532, 8.507059e+37
    %v1534 = vand.u32 %v1508, 2147483648
    %v1535 = vor.u32 1.1754944e-38, %v1534
    %v1536 = vsel %vm1533, %v1535, %v1531
    %1537 = vrot.lane.b32.xlu0 %v989, 72
    %v1538 = vpop.permute.xlu0 %1537
    %1539 = vrot.lane.b32.xlu0 %v992, 72
    %v1540 = vpop.permute.xlu0 %1539
    %v1544 = vsel %vm265, %v1500, 0
    %v1547 = vsel %vm265, %v1502, 0
    %1549 = vmatpush.msra.mxu0 0.0
    %1550 = vmatpush.msra.mxu0 0.0
    %1551 = vmatpush.msra.mxu0 0.0
    %1552 = vmatpush.msra.mxu0 0.0
    %1553 = vmatpush.msra.mxu0 0.0
    %1554 = vmatpush.msra.mxu0 0.0
    %1555 = vmatpush.msra.mxu0 0.0
    %1556 = vmatpush.msra.mxu0 0.0
    %1557 = vmatpush.msra.mxu0 0.0
    %1558 = vmatpush.msra.mxu0 0.0
    %1559 = vmatpush.msra.mxu0 0.0
    %1560 = vmatpush.msra.mxu0 0.0
    %1561 = vmatpush.msra.mxu0 0.0
    %1562 = vmatpush.msra.mxu0 0.0
    %1563 = vmatpush.msra.mxu0 %v1540
    %1564 = vmatpush.msra.mxu0 %v1538
    %1565 = vmatmul.f32.gmra.mxu0 %v1544
    %v1566 = vpop.f32.mrf.mxu0
    %v1567 = vadd.f32 0.0, %v1566
    %1568 = vmatmul.f32.gmra.mxu0 %v1547
    %v1569 = vpop.f32.mrf.mxu0
    %v1570 = vadd.f32 0.0, %v1569
    %1571 = vdwg.mxu0
    %v1572 = vmul.f32 %v1567, %v1522
    %v1573 = vmul.f32 %v1570, %v1536
    %v1575 = vsel %vm233, %v1572, 0
    %v1578 = vsel %vm233, %v1573, 0
    %1580 = vmatpush.msra.mxu0 0.0
    %1581 = vmatpush.msra.mxu0 0.0
    %1582 = vmatpush.msra.mxu0 0.0
    %1583 = vmatpush.msra.mxu0 0.0
    %1584 = vmatpush.msra.mxu0 0.0
    %1585 = vmatpush.msra.mxu0 0.0
    %1586 = vmatpush.msra.mxu0 0.0
    %1587 = vmatpush.msra.mxu0 0.0
    %1588 = vmatpush.msra.mxu0 0.0
    %1589 = vmatpush.msra.mxu0 0.0
    %1590 = vmatpush.msra.mxu0 0.0
    %1591 = vmatpush.msra.mxu0 0.0
    %1592 = vmatpush.msra.mxu0 0.0
    %1593 = vmatpush.msra.mxu0 0.0
    %1594 = vmatpush.msra.mxu0 0.0
    %1595 = vmatpush.msra.mxu0 %v999
    %1596 = vmatmul.f32.gmra.mxu0 %v1575
    %v1597 = vpop.f32.mrf.mxu0
    %v1598 = vadd.f32 0.0, %v1597
    %1599 = vmatmul.f32.gmra.mxu0 %v1578
    %v1600 = vpop.f32.mrf.mxu0
    %v1601 = vadd.f32 0.0, %v1600
    %1602 = vdwg.mxu0
    %v1603 = vadd.f32 %v1450, %v1598
    %v1604 = vadd.f32 %v1451, %v1601
    %v1605 = vperm.slane %v1000, 0
    %v1606 = vadd.f32 %v1603, %v1605
    %v1607 = vadd.f32 %v1604, %v1605
    %v1608 = vadd.f32 %v838, %v1606
    %v1609 = vadd.f32 %v839, %v1607
    %v1610 = vsel %vm93, %v1608, 0.0
    %1611 = vadd.xlane.f32.xlu0 %v1610
    %v1612 = vpop.xlane.xlu0 %1611
    %v1613 = vsel %vm93, %v1609, 0.0
    %1614 = vadd.xlane.f32.xlu0 %v1613
    %v1615 = vpop.xlane.xlu0 %1614
    %v1616 = vmul.f32 %v1612, %v106
    %v1617 = vmul.f32 %v1615, %v106
    %v1618 = vsub.f32 %v1608, %v1616
    %v1619 = vsub.f32 %v1609, %v1617
    %v1620 = vmul.f32 %v1618, %v1618
    %v1621 = vmul.f32 %v1619, %v1619
    %v1622 = vsel %vm93, %v1620, 0.0
    %1623 = vadd.xlane.f32.xlu0 %v1622
    %v1624 = vpop.xlane.xlu0 %1623
    %v1625 = vsel %vm93, %v1621, 0.0
    %1626 = vadd.xlane.f32.xlu0 %v1625
    %v1627 = vpop.xlane.xlu0 %1626
    %v1628 = vmul.f32 %v1624, 0.032258064
    %v1629 = vmul.f32 %v1627, 0.032258064
    %v1630 = vrsqrt.pop %v1628
    %v1631 = vmul.f32 %v1630, %v1628
    %v1632 = vmul.f32 %v1631, %v1630
    %v1633 = vmul.f32 0.5, %v1632
    %v1634 = vsub.f32 1.5, %v1633
    %v1635 = vmul.f32 %v1630, %v1634
    %v1636 = vmul.f32 %v1628, %v1635
    %vm1637 = vcmp.eq.f32.partialorder %v1628, inf
    %v1638 = vsel %vm1637, %v1628, %v1636
    %vm1639 = vcmp.eq.f32.partialorder %v1628, 0.0
    %v1640 = vand.u32 %v1628, 2147483648
    %v1641 = vsel %vm1639, %v1640, %v1638
    %v1642 = vrsqrt.pop %v1629
    %v1643 = vmul.f32 %v1642, %v1629
    %v1644 = vmul.f32 %v1643, %v1642
    %v1645 = vmul.f32 0.5, %v1644
    %v1646 = vsub.f32 1.5, %v1645
    %v1647 = vmul.f32 %v1642, %v1646
    %v1648 = vmul.f32 %v1629, %v1647
    %vm1649 = vcmp.eq.f32.partialorder %v1629, inf
    %v1650 = vsel %vm1649, %v1629, %v1648
    %vm1651 = vcmp.eq.f32.partialorder %v1629, 0.0
    %v1652 = vand.u32 %v1629, 2147483648
    %v1653 = vsel %vm1651, %v1652, %v1650
    %v1654 = vld [vmem:[#allocation7 + $0x4] sm:$0x1]
    %v1655 = vperm.slane %v1654, 0
    %v1656 = vmul.f32 %v1655, %v1618
    %v1657 = vmul.f32 %v1655, %v1619
    %v1658 = vadd.f32 %v1641, 1e-06
    %v1659 = vadd.f32 %v1653, 1e-06
    %v1660 = vrcp.pop %v1658
    %v1661 = vmul.f32 %v1658, %v1660
    %v1662 = vsub.f32 1.0, %v1661
    %v1663 = vmul.f32 %v1660, %v1662
    %v1664 = vadd.f32 %v1660, %v1663
    %vm1665 = vweird.f32 %v1658
    %vm1666 = vweird.f32 %v1660
    %vm1667 = vmor %vm1665, %vm1666
    %v1668 = vsel %vm1667, %v1660, %v1664
    %v1669 = vand.u32 2147483647, %v1658
    %vm1670 = vcmp.eq.f32.partialorder %v1669, 8.507059e+37
    %v1671 = vand.u32 %v1658, 2147483648
    %v1672 = vor.u32 1.1754944e-38, %v1671
    %v1673 = vsel %vm1670, %v1672, %v1668
    %v1674 = vrcp.pop %v1659
    %v1675 = vmul.f32 %v1659, %v1674
    %v1676 = vsub.f32 1.0, %v1675
    %v1677 = vmul.f32 %v1674, %v1676
    %v1678 = vadd.f32 %v1674, %v1677
    %vm1679 = vweird.f32 %v1659
    %vm1680 = vweird.f32 %v1674
    %vm1681 = vmor %vm1679, %vm1680
    %v1682 = vsel %vm1681, %v1674, %v1678
    %v1683 = vand.u32 2147483647, %v1659
    %vm1684 = vcmp.eq.f32.partialorder %v1683, 8.507059e+37
    %v1685 = vand.u32 %v1659, 2147483648
    %v1686 = vor.u32 1.1754944e-38, %v1685
    %v1687 = vsel %vm1684, %v1686, %v1682
    %v1688 = vmul.f32 %v1656, %v1673
    %v1689 = vmul.f32 %v1657, %v1687
    %v1690 = vld [vmem:[#allocation7 + $0x5] sm:$0x1]
    %v1691 = vperm.slane %v1690, 0
    %v1692 = vadd.f32 %v1688, %v1691
    %v1693 = vadd.f32 %v1689, %v1691
    %v1694 = vld [vmem:[%s10] sm:$0xff]
    %v1695 = vld [vmem:[%s10 + $0x8] sm:$0xff]
    %v1696 = vld [vmem:[%s10 + $0x10] sm:$0xff]
    %v1697 = vld [vmem:[%s10 + $0x18] sm:$0xff]
    %v1698 = vld [vmem:[#allocation7 + $0xb] sm:$0x1]
    %v1699 = vperm.slane %v1698, 0
    %v1701 = vsel %vm93, %v1692, 0
    %v1704 = vsel %vm93, %v1693, 0
    %1706 = vmatpush.msra.mxu0 0.0
    %1707 = vmatpush.msra.mxu0 0.0
    %1708 = vmatpush.msra.mxu0 0.0
    %1709 = vmatpush.msra.mxu0 0.0
    %1710 = vmatpush.msra.mxu0 0.0
    %1711 = vmatpush.msra.mxu0 0.0
    %1712 = vmatpush.msra.mxu0 0.0
    %1713 = vmatpush.msra.mxu0 0.0
    %1714 = vmatpush.msra.mxu0 0.0
    %1715 = vmatpush.msra.mxu0 0.0
    %1716 = vmatpush.msra.mxu0 0.0
    %1717 = vmatpush.msra.mxu0 0.0
    %1718 = vmatpush.msra.mxu0 %v1697
    %1719 = vmatpush.msra.mxu0 %v1696
    %1720 = vmatpush.msra.mxu0 %v1695
    %1721 = vmatpush.msra.mxu0 %v1694
    %1722 = vmatmul.f32.gmra.mxu0 %v1701
    %v1723 = vpop.f32.mrf.mxu0
    %v1724 = vadd.f32 %v1699, %v1723
    %1725 = vmatmul.f32.gmra.mxu0 %v1704
    %v1726 = vpop.f32.mrf.mxu0
    %v1727 = vadd.f32 %v1699, %v1726
    %1728 = vdwg.mxu0
    %v1729 = vmax.f32 %v1724, 0.0
    %v1730 = vmax.f32 %v1727, 0.0
    %v1731 = vld [vmem:[%s11] sm:$0xff]
    %v1732 = vld [vmem:[%s11 + $0x8] sm:$0xff]
    %v1733 = vld [vmem:[%s11 + $0x10] sm:$0xff]
    %v1734 = vld [vmem:[%s11 + $0x18] sm:$0xff]
    %v1735 = vld [vmem:[%s11 + $0x20] sm:$0xff]
    %v1736 = vld [vmem:[%s11 + $0x28] sm:$0xff]
    %v1737 = vld [vmem:[%s11 + $0x30] sm:$0xff]
    %v1738 = vld [vmem:[%s11 + $0x38] sm:$0xff]
    %v1739 = vld [vmem:[#allocation7 + $0xc] sm:$0x1]
    %v1740 = vperm.slane %v1739, 0
    %vm1741 = vcmask 523264
    %v1743 = vsel %vm1741, %v1729, 0
    %v1746 = vsel %vm1741, %v1730, 0
    %1748 = vmatpush.msra.mxu0 0.0
    %1749 = vmatpush.msra.mxu0 0.0
    %1750 = vmatpush.msra.mxu0 0.0
    %1751 = vmatpush.msra.mxu0 0.0
    %1752 = vmatpush.msra.mxu0 0.0
    %1753 = vmatpush.msra.mxu0 0.0
    %1754 = vmatpush.msra.mxu0 0.0
    %1755 = vmatpush.msra.mxu0 0.0
    %1756 = vmatpush.msra.mxu0 %v1738
    %1757 = vmatpush.msra.mxu0 %v1737
    %1758 = vmatpush.msra.mxu0 %v1736
    %1759 = vmatpush.msra.mxu0 %v1735
    %1760 = vmatpush.msra.mxu0 %v1734
    %1761 = vmatpush.msra.mxu0 %v1733
    %1762 = vmatpush.msra.mxu0 %v1732
    %1763 = vmatpush.msra.mxu0 %v1731
    %1764 = vmatmul.f32.gmra.mxu0 %v1743
    %v1765 = vpop.f32.mrf.mxu0
    %v1766 = vadd.f32 %v1740, %v1765
    %1767 = vmatmul.f32.gmra.mxu0 %v1746
    %v1768 = vpop.f32.mrf.mxu0
    %v1769 = vadd.f32 %v1740, %v1768
    %1770 = vdwg.mxu0
    %v1771 = vadd.f32 %v1608, %v1766
    %v1772 = vadd.f32 %v1609, %v1769
    %1773 = vst.msk [vmem:[#allocation8] sm:$0xff] %vm93, %v1771
    %1774 = vst.msk [vmem:[#allocation8 + $0x8] sm:$0xff] %vm93, %v1772
    // Predicated region
    $region62: #{decoder_layer_forward.1} parent=1 // pred_check
      _
    $region63: #{decoder_layer_forward.1} parent=1 // pred_check_branch
      %1776 = sbr.rel (0) target = $region65
    $region64: #{decoder_layer_forward.1} parent=1 // pred_region
      %1778 = vsyncadd [#allocation4], 0
      %s1779 = sshll.u32 [#allocation8], 4
      %s1780 = int_to_ptr.vmem [resolvable:$true] %s1779
      %s1781 = sshll.u32 %s12, 4
      %s1782 = int_to_ptr.hbm [resolvable:$true] %s1781
      %1787 = dma.vmem_to_hbm [thread:$0]  %s1780, 256, %s1782, [#allocation4], 128, 128, 8
    $region65: #{decoder_layer_forward.1} parent=1 // pred_fallthru
      _
    // Predicated region
    $region66: #{decoder_layer_forward.1} parent=1 // pred_check
      _
    $region67: #{decoder_layer_forward.1} parent=1 // pred_check_branch
      %1789 = sbr.rel (0) target = $region69
    $region68: #{decoder_layer_forward.1} parent=1 // pred_region
      %1791 = dma.done [#allocation4], 256
    $region69: #{decoder_layer_forward.1} parent=1 // pred_fallthru
      _
    %1792 = vsyncpa [#allocation3], 1
    %1793 = vsyncpa [#allocation6], 1
    %1794 = vsyncpa [#allocation4], 1

</llo_original>
